<compile_context>
chip_gen: v7x
topology: tpu7x:2x2x1
jax: 0.10.0
libtpu: 0.0.40
codegen_flags: <defaults>
</compile_context>

<pallas_src>
import functools

import jax
import jax.numpy as jnp
import numpy as np
from jax import lax
from jax.experimental import pallas as pl
from jax.experimental.pallas import tpu as pltpu


def _sepconv_kernel(xp_ref, dw_ref, pw_ref, gamma_ref, beta_ref, out_ref,
                    *, dims, residual, eps, matmul_dtype):
    """Fused depthwise(KTxKHxKW) + pointwise(1x1x1) + BN(train) + residual + ReLU.

    Lane-dense layout everywhere: rows = (n, t, h), lanes = (w, channel).
    """
    N, T, H, W, C, Cout, KT, KH, KW = dims
    R = N * T * H
    WC = W * C
    WCo = W * Cout

    # ---- depthwise conv: 27 shifted lane-dense reads from the ref, VPU MACs ----
    acc = None
    x_center = None
    tap = 0
    for kd in range(KT):
        for kh in range(KH):
            for kw in range(KW):
                sl = xp_ref[:, kd:kd + T, kh:kh + H,
                            kw * C:kw * C + WC].reshape(R, WC)
                if residual and (kd, kh, kw) == (KT // 2, KH // 2, KW // 2):
                    x_center = sl                       # center tap == original x
                w_tap = dw_ref[pl.ds(tap, 1), :]        # (1, WC) per-channel taps
                acc = sl * w_tap if acc is None else acc + sl * w_tap
                tap += 1

    # ---- pointwise 1x1x1 conv: ONE dense MXU matmul (bf16 operands, f32 acc) ----
    # pw_ref is block-diagonal over the W lane groups, so the (R, WCo) result keeps
    # the same (w, channel) lane layout as x -> no relayout for residual / store.
    pre = jnp.dot(acc.astype(matmul_dtype), pw_ref[...],
                  preferred_element_type=jnp.float32)   # (R, WCo) f32

    # ---- BatchNorm3d, training mode: global batch stats over (N,T,H,W), f32 ----
    inv_cnt = 1.0 / float(R * W)
    s1 = jnp.sum(pre, axis=0, keepdims=True)            # (1, WCo)
    s2 = jnp.sum(pre * pre, axis=0, keepdims=True)      # (1, WCo)
    if (W & (W - 1)) == 0:
        # log2(W) XLU roll+add tree: afterwards every Cout-lane group already holds
        # the per-channel total, i.e. the result is pre-broadcast across W.
        step = (W // 2) * Cout
        while step >= Cout:
            s1 = s1 + pltpu.roll(s1, shift=step, axis=1)
            s2 = s2 + pltpu.roll(s2, shift=step, axis=1)
            step //= 2
    else:
        # Fallback for non power-of-two W (not exercised at these shapes).
        t1 = s1[:, 0:Cout]
        t2 = s2[:, 0:Cout]
        for w in range(1, W):
            t1 = t1 + s1[:, w * Cout:(w + 1) * Cout]
            t2 = t2 + s2[:, w * Cout:(w + 1) * Cout]
        s1 = jnp.concatenate([t1] * W, axis=1)
        s2 = jnp.concatenate([t2] * W, axis=1)

    mean = s1 * inv_cnt                                  # (1, WCo), per-channel
    var = s2 * inv_cnt - mean * mean                     # biased batch variance
    scale = gamma_ref[...] * lax.rsqrt(var + eps)        # gamma/beta pre-tiled (1, WCo)
    shift = beta_ref[...] - mean * scale
    y = pre * scale + shift

    # ---- residual + ReLU, dense unmasked (R, 128) store ----
    if residual:
        y = y + x_center
    out_ref[...] = jnp.maximum(y, 0.0)


def prepare_separable_conv_params(dw_w, pw_w, gamma, beta, W, *,
                                  matmul_dtype=jnp.bfloat16):
    """One-time (per parameter update) weight re-layouts. Keep OUT of the hot path.

    dw_w:  (KT, KH, KW, C) depthwise weights (torch (C,1,KT,KH,KW) permuted).
    pw_w:  (C, Cout) pointwise 1x1x1 weights (torch (Cout,C,1,1,1) -> [c, o]).
    gamma, beta: (Cout,) BatchNorm3d affine parameters.
    """
    KT, KH, KW, C = dw_w.shape
    _, Cout = pw_w.shape
    taps = KT * KH * KW
    # Depthwise per-channel taps tiled across the W lane groups: (taps, W*C).
    dw_lanes = jnp.tile(dw_w.reshape(taps, C).astype(jnp.float32), (1, W))
    # Pointwise conv as one block-diagonal lane-dense matmul weight (W*C, W*Cout).
    pw_bd = jnp.einsum('co,wv->wcvo', pw_w.astype(jnp.float32),
                       jnp.eye(W, dtype=jnp.float32))
    pw_bd = pw_bd.reshape(W * C, W * Cout).astype(matmul_dtype)
    # BN affine params pre-tiled to the (w, channel) lane layout.
    gamma_l = jnp.tile(gamma.reshape(1, Cout).astype(jnp.float32), (1, W))
    beta_l = jnp.tile(beta.reshape(1, Cout).astype(jnp.float32), (1, W))
    return dw_lanes, pw_bd, gamma_l, beta_l


def separable_conv_block_3d(x, dw_lanes, pw_bd, gamma_l, beta_l, *,
                            kernel_size=(3, 3, 3), residual=True, eps=1e-5,
                            matmul_dtype=jnp.bfloat16):
    """x: (N, T, H, W, C) f32 channels-last (PyTorch NCDHW input permuted to NDHWC)."""
    N, T, H, W, C = x.shape
    KT, KH, KW = kernel_size
    taps = KT * KH * KW
    WC = W * C
    WCo = pw_bd.shape[1]
    Cout = WCo // W
    assert dw_lanes.shape == (taps, WC)
    assert pw_bd.shape[0] == WC and gamma_l.shape == (1, WCo)
    if residual:
        assert Cout == C, "residual connection requires out_channels == in_channels"

    pt, ph, pw_pad = KT // 2, KH // 2, KW // 2
    R = N * T * H
    WpC = (W + 2 * pw_pad) * C

    # Halo-pad once and fold (W, C) into a single lane-dense last dimension.
    xp = jnp.pad(x.astype(jnp.float32),
                 ((0, 0), (pt, pt), (ph, ph), (pw_pad, pw_pad), (0, 0)))
    xp = xp.reshape(N, T + 2 * pt, H + 2 * ph, WpC)

    kernel = functools.partial(
        _sepconv_kernel,
        dims=(N, T, H, W, C, Cout, KT, KH, KW),
        residual=residual, eps=eps, matmul_dtype=matmul_dtype)

    vmem = pl.BlockSpec(memory_space=pltpu.MemorySpace.VMEM)
    mm_itemsize = jnp.dtype(matmul_dtype).itemsize
    flops = 2 * taps * R * WC + 2 * R * WC * WCo + 8 * R * WCo
    bytes_accessed = (N * (T + 2 * pt) * (H + 2 * ph) * WpC * 4
                      + taps * WC * 4 + WC * WCo * mm_itemsize
                      + 2 * WCo * 4 + R * WCo * 4)
    # VMEM budget from the actual resident buffers (+ generous headroom); keeps us
    # well under the 32 MiB default scoped limit, including on v7x (64 MiB physical).
    vmem_bytes = int(min(32 * 1024 * 1024, max(4 * 1024 * 1024, 4 * bytes_accessed)))

    out = pl.pallas_call(
        kernel,
        out_shape=jax.ShapeDtypeStruct((R, WCo), jnp.float32),
        in_specs=[vmem] * 5,
        out_specs=vmem,
        compiler_params=pltpu.CompilerParams(vmem_limit_bytes=vmem_bytes),
        cost_estimate=pl.CostEstimate(flops=flops, transcendentals=WCo,
                                      bytes_accessed=bytes_accessed),
    )(xp, dw_lanes, pw_bd, gamma_l, beta_l)

    return out.reshape(N, T, H, W, Cout)


def reference(x, dw_w, pw_w, gamma, beta, *, residual=True, eps=1e-5):
    """Pure-JAX (all-f32) reference with identical channels-last weight layout."""
    C = x.shape[-1]
    KT, KH, KW, _ = dw_w.shape
    dw_out = lax.conv_general_dilated(
        x, dw_w.reshape(KT, KH, KW, 1, C),
        window_strides=(1, 1, 1),
        padding=[(KT // 2, KT // 2), (KH // 2, KH // 2), (KW // 2, KW // 2)],
        dimension_numbers=('NDHWC', 'DHWIO', 'NDHWC'),
        feature_group_count=C)
    pre = jnp.einsum('ndhwc,co->ndhwo', dw_out, pw_w)
    mean = jnp.mean(pre, axis=(0, 1, 2, 3), keepdims=True)
    var = jnp.mean(jnp.square(pre - mean), axis=(0, 1, 2, 3), keepdims=True)
    y = (pre - mean) * lax.rsqrt(var + eps) * gamma + beta
    if residual:
        y = y + x
    return jax.nn.relu(y)


if __name__ == "__main__":
    # Module config: in_channels = out_channels = 16, in_temporal = 1,
    # spatial/temporal kernel size 3, no downsampling, residual = True.
    N, T, H, W, C = 2, 4, 8, 8, 16
    Cout = 16
    KT = KH = KW = 3

    key = jax.random.PRNGKey(0)
    kx, kdw, kpw, kg, kb = jax.random.split(key, 5)
    # Channels-last NDHWC (== PyTorch NCDHW input permuted (0, 2, 3, 4, 1)).
    x = jax.random.normal(kx, (N, T, H, W, C), jnp.float32)
    dw_w = 0.1 * jax.random.normal(kdw, (KT, KH, KW, C), jnp.float32)
    pw_w = 0.1 * jax.random.normal(kpw, (C, Cout), jnp.float32)
    gamma = 1.0 + 0.1 * jax.random.normal(kg, (Cout,), jnp.float32)
    beta = 0.1 * jax.random.normal(kb, (Cout,), jnp.float32)

    # Weight re-layouts done ONCE (per parameter update), outside the hot path.
    params = prepare_separable_conv_params(dw_w, pw_w, gamma, beta, W)
    params = jax.tree_util.tree_map(jax.block_until_ready, params)

    fwd = jax.jit(functools.partial(separable_conv_block_3d,
                                    kernel_size=(KT, KH, KW), residual=True))
    out = jax.block_until_ready(fwd(x, *params))
    ref = jax.block_until_ready(reference(x, dw_w, pw_w, gamma, beta))
    # Tolerance accounts for the bf16 MXU operands (BN/residual are f32).
    np.testing.assert_allclose(np.asarray(out), np.asarray(ref), rtol=2e-2, atol=2e-2)
    print("KERNEL_OK")
</pallas_src>

<mosaic_0001>
module attributes {stable_mosaic.version = 11 : i64} {
  func.func @_sepconv_kernel(%arg0: memref<2x6x10x160xf32, #tpu.memory_space<vmem>>, %arg1: memref<27x128xf32, #tpu.memory_space<vmem>>, %arg2: memref<128x128xbf16, #tpu.memory_space<vmem>>, %arg3: memref<1x128xf32, #tpu.memory_space<vmem>>, %arg4: memref<1x128xf32, #tpu.memory_space<vmem>>, %arg5: memref<64x128xf32, #tpu.memory_space<vmem>>) attributes {dimension_semantics = [], scalar_prefetch = 0 : i64, scratch_operands = 0 : i64, tpu.core_type = #tpu.core_type<tc>} {
    %c0 = arith.constant 0 : index
    %c0_0 = arith.constant 0 : index
    %c0_1 = arith.constant 0 : index
    %c0_2 = arith.constant 0 : index
    %0 = vector.load %arg0[%c0, %c0_0, %c0_1, %c0_2] : memref<2x6x10x160xf32, #tpu.memory_space<vmem>>, vector<2x4x8x128xf32>
    %1 = vector.shape_cast %0 : vector<2x4x8x128xf32> to vector<64x128xf32>
    %c0_3 = arith.constant 0 : index
    %c0_4 = arith.constant 0 : index
    %2 = vector.load %arg1[%c0_3, %c0_4] : memref<27x128xf32, #tpu.memory_space<vmem>>, vector<1x128xf32>
    %3 = vector.broadcast %2 : vector<1x128xf32> to vector<64x128xf32>
    %4 = arith.mulf %1, %3 : vector<64x128xf32>
    %c0_5 = arith.constant 0 : index
    %c0_6 = arith.constant 0 : index
    %c0_7 = arith.constant 0 : index
    %c16 = arith.constant 16 : index
    %5 = vector.load %arg0[%c0_5, %c0_6, %c0_7, %c16] : memref<2x6x10x160xf32, #tpu.memory_space<vmem>>, vector<2x4x8x128xf32>
    %6 = vector.shape_cast %5 : vector<2x4x8x128xf32> to vector<64x128xf32>
    %c1 = arith.constant 1 : index
    %c0_8 = arith.constant 0 : index
    %7 = vector.load %arg1[%c1, %c0_8] : memref<27x128xf32, #tpu.memory_space<vmem>>, vector<1x128xf32>
    %8 = vector.broadcast %7 : vector<1x128xf32> to vector<64x128xf32>
    %9 = arith.mulf %6, %8 : vector<64x128xf32>
    %10 = arith.addf %4, %9 : vector<64x128xf32>
    %c0_9 = arith.constant 0 : index
    %c0_10 = arith.constant 0 : index
    %c0_11 = arith.constant 0 : index
    %c32 = arith.constant 32 : index
    %11 = vector.load %arg0[%c0_9, %c0_10, %c0_11, %c32] : memref<2x6x10x160xf32, #tpu.memory_space<vmem>>, vector<2x4x8x128xf32>
    %12 = vector.shape_cast %11 : vector<2x4x8x128xf32> to vector<64x128xf32>
    %c2 = arith.constant 2 : index
    %c0_12 = arith.constant 0 : index
    %13 = vector.load %arg1[%c2, %c0_12] : memref<27x128xf32, #tpu.memory_space<vmem>>, vector<1x128xf32>
    %14 = vector.broadcast %13 : vector<1x128xf32> to vector<64x128xf32>
    %15 = arith.mulf %12, %14 : vector<64x128xf32>
    %16 = arith.addf %10, %15 : vector<64x128xf32>
    %c0_13 = arith.constant 0 : index
    %c0_14 = arith.constant 0 : index
    %c1_15 = arith.constant 1 : index
    %c0_16 = arith.constant 0 : index
    %17 = vector.load %arg0[%c0_13, %c0_14, %c1_15, %c0_16] : memref<2x6x10x160xf32, #tpu.memory_space<vmem>>, vector<2x4x8x128xf32>
    %18 = vector.shape_cast %17 : vector<2x4x8x128xf32> to vector<64x128xf32>
    %c3 = arith.constant 3 : index
    %c0_17 = arith.constant 0 : index
    %19 = vector.load %arg1[%c3, %c0_17] : memref<27x128xf32, #tpu.memory_space<vmem>>, vector<1x128xf32>
    %20 = vector.broadcast %19 : vector<1x128xf32> to vector<64x128xf32>
    %21 = arith.mulf %18, %20 : vector<64x128xf32>
    %22 = arith.addf %16, %21 : vector<64x128xf32>
    %c0_18 = arith.constant 0 : index
    %c0_19 = arith.constant 0 : index
    %c1_20 = arith.constant 1 : index
    %c16_21 = arith.constant 16 : index
    %23 = vector.load %arg0[%c0_18, %c0_19, %c1_20, %c16_21] : memref<2x6x10x160xf32, #tpu.memory_space<vmem>>, vector<2x4x8x128xf32>
    %24 = vector.shape_cast %23 : vector<2x4x8x128xf32> to vector<64x128xf32>
    %c4 = arith.constant 4 : index
    %c0_22 = arith.constant 0 : index
    %25 = vector.load %arg1[%c4, %c0_22] : memref<27x128xf32, #tpu.memory_space<vmem>>, vector<1x128xf32>
    %26 = vector.broadcast %25 : vector<1x128xf32> to vector<64x128xf32>
    %27 = arith.mulf %24, %26 : vector<64x128xf32>
    %28 = arith.addf %22, %27 : vector<64x128xf32>
    %c0_23 = arith.constant 0 : index
    %c0_24 = arith.constant 0 : index
    %c1_25 = arith.constant 1 : index
    %c32_26 = arith.constant 32 : index
    %29 = vector.load %arg0[%c0_23, %c0_24, %c1_25, %c32_26] : memref<2x6x10x160xf32, #tpu.memory_space<vmem>>, vector<2x4x8x128xf32>
    %30 = vector.shape_cast %29 : vector<2x4x8x128xf32> to vector<64x128xf32>
    %c5 = arith.constant 5 : index
    %c0_27 = arith.constant 0 : index
    %31 = vector.load %arg1[%c5, %c0_27] : memref<27x128xf32, #tpu.memory_space<vmem>>, vector<1x128xf32>
    %32 = vector.broadcast %31 : vector<1x128xf32> to vector<64x128xf32>
    %33 = arith.mulf %30, %32 : vector<64x128xf32>
    %34 = arith.addf %28, %33 : vector<64x128xf32>
    %c0_28 = arith.constant 0 : index
    %c0_29 = arith.constant 0 : index
    %c2_30 = arith.constant 2 : index
    %c0_31 = arith.constant 0 : index
    %35 = vector.load %arg0[%c0_28, %c0_29, %c2_30, %c0_31] : memref<2x6x10x160xf32, #tpu.memory_space<vmem>>, vector<2x4x8x128xf32>
    %36 = vector.shape_cast %35 : vector<2x4x8x128xf32> to vector<64x128xf32>
    %c6 = arith.constant 6 : index
    %c0_32 = arith.constant 0 : index
    %37 = vector.load %arg1[%c6, %c0_32] : memref<27x128xf32, #tpu.memory_space<vmem>>, vector<1x128xf32>
    %38 = vector.broadcast %37 : vector<1x128xf32> to vector<64x128xf32>
    %39 = arith.mulf %36, %38 : vector<64x128xf32>
    %40 = arith.addf %34, %39 : vector<64x128xf32>
    %c0_33 = arith.constant 0 : index
    %c0_34 = arith.constant 0 : index
    %c2_35 = arith.constant 2 : index
    %c16_36 = arith.constant 16 : index
    %41 = vector.load %arg0[%c0_33, %c0_34, %c2_35, %c16_36] : memref<2x6x10x160xf32, #tpu.memory_space<vmem>>, vector<2x4x8x128xf32>
    %42 = vector.shape_cast %41 : vector<2x4x8x128xf32> to vector<64x128xf32>
    %c7 = arith.constant 7 : index
    %c0_37 = arith.constant 0 : index
    %43 = vector.load %arg1[%c7, %c0_37] : memref<27x128xf32, #tpu.memory_space<vmem>>, vector<1x128xf32>
    %44 = vector.broadcast %43 : vector<1x128xf32> to vector<64x128xf32>
    %45 = arith.mulf %42, %44 : vector<64x128xf32>
    %46 = arith.addf %40, %45 : vector<64x128xf32>
    %c0_38 = arith.constant 0 : index
    %c0_39 = arith.constant 0 : index
    %c2_40 = arith.constant 2 : index
    %c32_41 = arith.constant 32 : index
    %47 = vector.load %arg0[%c0_38, %c0_39, %c2_40, %c32_41] : memref<2x6x10x160xf32, #tpu.memory_space<vmem>>, vector<2x4x8x128xf32>
    %48 = vector.shape_cast %47 : vector<2x4x8x128xf32> to vector<64x128xf32>
    %c8 = arith.constant 8 : index
    %c0_42 = arith.constant 0 : index
    %49 = vector.load %arg1[%c8, %c0_42] : memref<27x128xf32, #tpu.memory_space<vmem>>, vector<1x128xf32>
    %50 = vector.broadcast %49 : vector<1x128xf32> to vector<64x128xf32>
    %51 = arith.mulf %48, %50 : vector<64x128xf32>
    %52 = arith.addf %46, %51 : vector<64x128xf32>
    %c0_43 = arith.constant 0 : index
    %c1_44 = arith.constant 1 : index
    %c0_45 = arith.constant 0 : index
    %c0_46 = arith.constant 0 : index
    %53 = vector.load %arg0[%c0_43, %c1_44, %c0_45, %c0_46] : memref<2x6x10x160xf32, #tpu.memory_space<vmem>>, vector<2x4x8x128xf32>
    %54 = vector.shape_cast %53 : vector<2x4x8x128xf32> to vector<64x128xf32>
    %c9 = arith.constant 9 : index
    %c0_47 = arith.constant 0 : index
    %55 = vector.load %arg1[%c9, %c0_47] : memref<27x128xf32, #tpu.memory_space<vmem>>, vector<1x128xf32>
    %56 = vector.broadcast %55 : vector<1x128xf32> to vector<64x128xf32>
    %57 = arith.mulf %54, %56 : vector<64x128xf32>
    %58 = arith.addf %52, %57 : vector<64x128xf32>
    %c0_48 = arith.constant 0 : index
    %c1_49 = arith.constant 1 : index
    %c0_50 = arith.constant 0 : index
    %c16_51 = arith.constant 16 : index
    %59 = vector.load %arg0[%c0_48, %c1_49, %c0_50, %c16_51] : memref<2x6x10x160xf32, #tpu.memory_space<vmem>>, vector<2x4x8x128xf32>
    %60 = vector.shape_cast %59 : vector<2x4x8x128xf32> to vector<64x128xf32>
    %c10 = arith.constant 10 : index
    %c0_52 = arith.constant 0 : index
    %61 = vector.load %arg1[%c10, %c0_52] : memref<27x128xf32, #tpu.memory_space<vmem>>, vector<1x128xf32>
    %62 = vector.broadcast %61 : vector<1x128xf32> to vector<64x128xf32>
    %63 = arith.mulf %60, %62 : vector<64x128xf32>
    %64 = arith.addf %58, %63 : vector<64x128xf32>
    %c0_53 = arith.constant 0 : index
    %c1_54 = arith.constant 1 : index
    %c0_55 = arith.constant 0 : index
    %c32_56 = arith.constant 32 : index
    %65 = vector.load %arg0[%c0_53, %c1_54, %c0_55, %c32_56] : memref<2x6x10x160xf32, #tpu.memory_space<vmem>>, vector<2x4x8x128xf32>
    %66 = vector.shape_cast %65 : vector<2x4x8x128xf32> to vector<64x128xf32>
    %c11 = arith.constant 11 : index
    %c0_57 = arith.constant 0 : index
    %67 = vector.load %arg1[%c11, %c0_57] : memref<27x128xf32, #tpu.memory_space<vmem>>, vector<1x128xf32>
    %68 = vector.broadcast %67 : vector<1x128xf32> to vector<64x128xf32>
    %69 = arith.mulf %66, %68 : vector<64x128xf32>
    %70 = arith.addf %64, %69 : vector<64x128xf32>
    %c0_58 = arith.constant 0 : index
    %c1_59 = arith.constant 1 : index
    %c1_60 = arith.constant 1 : index
    %c0_61 = arith.constant 0 : index
    %71 = vector.load %arg0[%c0_58, %c1_59, %c1_60, %c0_61] : memref<2x6x10x160xf32, #tpu.memory_space<vmem>>, vector<2x4x8x128xf32>
    %72 = vector.shape_cast %71 : vector<2x4x8x128xf32> to vector<64x128xf32>
    %c12 = arith.constant 12 : index
    %c0_62 = arith.constant 0 : index
    %73 = vector.load %arg1[%c12, %c0_62] : memref<27x128xf32, #tpu.memory_space<vmem>>, vector<1x128xf32>
    %74 = vector.broadcast %73 : vector<1x128xf32> to vector<64x128xf32>
    %75 = arith.mulf %72, %74 : vector<64x128xf32>
    %76 = arith.addf %70, %75 : vector<64x128xf32>
    %c0_63 = arith.constant 0 : index
    %c1_64 = arith.constant 1 : index
    %c1_65 = arith.constant 1 : index
    %c16_66 = arith.constant 16 : index
    %77 = vector.load %arg0[%c0_63, %c1_64, %c1_65, %c16_66] : memref<2x6x10x160xf32, #tpu.memory_space<vmem>>, vector<2x4x8x128xf32>
    %78 = vector.shape_cast %77 : vector<2x4x8x128xf32> to vector<64x128xf32>
    %c13 = arith.constant 13 : index
    %c0_67 = arith.constant 0 : index
    %79 = vector.load %arg1[%c13, %c0_67] : memref<27x128xf32, #tpu.memory_space<vmem>>, vector<1x128xf32>
    %80 = vector.broadcast %79 : vector<1x128xf32> to vector<64x128xf32>
    %81 = arith.mulf %78, %80 : vector<64x128xf32>
    %82 = arith.addf %76, %81 : vector<64x128xf32>
    %c0_68 = arith.constant 0 : index
    %c1_69 = arith.constant 1 : index
    %c1_70 = arith.constant 1 : index
    %c32_71 = arith.constant 32 : index
    %83 = vector.load %arg0[%c0_68, %c1_69, %c1_70, %c32_71] : memref<2x6x10x160xf32, #tpu.memory_space<vmem>>, vector<2x4x8x128xf32>
    %84 = vector.shape_cast %83 : vector<2x4x8x128xf32> to vector<64x128xf32>
    %c14 = arith.constant 14 : index
    %c0_72 = arith.constant 0 : index
    %85 = vector.load %arg1[%c14, %c0_72] : memref<27x128xf32, #tpu.memory_space<vmem>>, vector<1x128xf32>
    %86 = vector.broadcast %85 : vector<1x128xf32> to vector<64x128xf32>
    %87 = arith.mulf %84, %86 : vector<64x128xf32>
    %88 = arith.addf %82, %87 : vector<64x128xf32>
    %c0_73 = arith.constant 0 : index
    %c1_74 = arith.constant 1 : index
    %c2_75 = arith.constant 2 : index
    %c0_76 = arith.constant 0 : index
    %89 = vector.load %arg0[%c0_73, %c1_74, %c2_75, %c0_76] : memref<2x6x10x160xf32, #tpu.memory_space<vmem>>, vector<2x4x8x128xf32>
    %90 = vector.shape_cast %89 : vector<2x4x8x128xf32> to vector<64x128xf32>
    %c15 = arith.constant 15 : index
    %c0_77 = arith.constant 0 : index
    %91 = vector.load %arg1[%c15, %c0_77] : memref<27x128xf32, #tpu.memory_space<vmem>>, vector<1x128xf32>
    %92 = vector.broadcast %91 : vector<1x128xf32> to vector<64x128xf32>
    %93 = arith.mulf %90, %92 : vector<64x128xf32>
    %94 = arith.addf %88, %93 : vector<64x128xf32>
    %c0_78 = arith.constant 0 : index
    %c1_79 = arith.constant 1 : index
    %c2_80 = arith.constant 2 : index
    %c16_81 = arith.constant 16 : index
    %95 = vector.load %arg0[%c0_78, %c1_79, %c2_80, %c16_81] : memref<2x6x10x160xf32, #tpu.memory_space<vmem>>, vector<2x4x8x128xf32>
    %96 = vector.shape_cast %95 : vector<2x4x8x128xf32> to vector<64x128xf32>
    %c16_82 = arith.constant 16 : index
    %c0_83 = arith.constant 0 : index
    %97 = vector.load %arg1[%c16_82, %c0_83] : memref<27x128xf32, #tpu.memory_space<vmem>>, vector<1x128xf32>
    %98 = vector.broadcast %97 : vector<1x128xf32> to vector<64x128xf32>
    %99 = arith.mulf %96, %98 : vector<64x128xf32>
    %100 = arith.addf %94, %99 : vector<64x128xf32>
    %c0_84 = arith.constant 0 : index
    %c1_85 = arith.constant 1 : index
    %c2_86 = arith.constant 2 : index
    %c32_87 = arith.constant 32 : index
    %101 = vector.load %arg0[%c0_84, %c1_85, %c2_86, %c32_87] : memref<2x6x10x160xf32, #tpu.memory_space<vmem>>, vector<2x4x8x128xf32>
    %102 = vector.shape_cast %101 : vector<2x4x8x128xf32> to vector<64x128xf32>
    %c17 = arith.constant 17 : index
    %c0_88 = arith.constant 0 : index
    %103 = vector.load %arg1[%c17, %c0_88] : memref<27x128xf32, #tpu.memory_space<vmem>>, vector<1x128xf32>
    %104 = vector.broadcast %103 : vector<1x128xf32> to vector<64x128xf32>
    %105 = arith.mulf %102, %104 : vector<64x128xf32>
    %106 = arith.addf %100, %105 : vector<64x128xf32>
    %c0_89 = arith.constant 0 : index
    %c2_90 = arith.constant 2 : index
    %c0_91 = arith.constant 0 : index
    %c0_92 = arith.constant 0 : index
    %107 = vector.load %arg0[%c0_89, %c2_90, %c0_91, %c0_92] : memref<2x6x10x160xf32, #tpu.memory_space<vmem>>, vector<2x4x8x128xf32>
    %108 = vector.shape_cast %107 : vector<2x4x8x128xf32> to vector<64x128xf32>
    %c18 = arith.constant 18 : index
    %c0_93 = arith.constant 0 : index
    %109 = vector.load %arg1[%c18, %c0_93] : memref<27x128xf32, #tpu.memory_space<vmem>>, vector<1x128xf32>
    %110 = vector.broadcast %109 : vector<1x128xf32> to vector<64x128xf32>
    %111 = arith.mulf %108, %110 : vector<64x128xf32>
    %112 = arith.addf %106, %111 : vector<64x128xf32>
    %c0_94 = arith.constant 0 : index
    %c2_95 = arith.constant 2 : index
    %c0_96 = arith.constant 0 : index
    %c16_97 = arith.constant 16 : index
    %113 = vector.load %arg0[%c0_94, %c2_95, %c0_96, %c16_97] : memref<2x6x10x160xf32, #tpu.memory_space<vmem>>, vector<2x4x8x128xf32>
    %114 = vector.shape_cast %113 : vector<2x4x8x128xf32> to vector<64x128xf32>
    %c19 = arith.constant 19 : index
    %c0_98 = arith.constant 0 : index
    %115 = vector.load %arg1[%c19, %c0_98] : memref<27x128xf32, #tpu.memory_space<vmem>>, vector<1x128xf32>
    %116 = vector.broadcast %115 : vector<1x128xf32> to vector<64x128xf32>
    %117 = arith.mulf %114, %116 : vector<64x128xf32>
    %118 = arith.addf %112, %117 : vector<64x128xf32>
    %c0_99 = arith.constant 0 : index
    %c2_100 = arith.constant 2 : index
    %c0_101 = arith.constant 0 : index
    %c32_102 = arith.constant 32 : index
    %119 = vector.load %arg0[%c0_99, %c2_100, %c0_101, %c32_102] : memref<2x6x10x160xf32, #tpu.memory_space<vmem>>, vector<2x4x8x128xf32>
    %120 = vector.shape_cast %119 : vector<2x4x8x128xf32> to vector<64x128xf32>
    %c20 = arith.constant 20 : index
    %c0_103 = arith.constant 0 : index
    %121 = vector.load %arg1[%c20, %c0_103] : memref<27x128xf32, #tpu.memory_space<vmem>>, vector<1x128xf32>
    %122 = vector.broadcast %121 : vector<1x128xf32> to vector<64x128xf32>
    %123 = arith.mulf %120, %122 : vector<64x128xf32>
    %124 = arith.addf %118, %123 : vector<64x128xf32>
    %c0_104 = arith.constant 0 : index
    %c2_105 = arith.constant 2 : index
    %c1_106 = arith.constant 1 : index
    %c0_107 = arith.constant 0 : index
    %125 = vector.load %arg0[%c0_104, %c2_105, %c1_106, %c0_107] : memref<2x6x10x160xf32, #tpu.memory_space<vmem>>, vector<2x4x8x128xf32>
    %126 = vector.shape_cast %125 : vector<2x4x8x128xf32> to vector<64x128xf32>
    %c21 = arith.constant 21 : index
    %c0_108 = arith.constant 0 : index
    %127 = vector.load %arg1[%c21, %c0_108] : memref<27x128xf32, #tpu.memory_space<vmem>>, vector<1x128xf32>
    %128 = vector.broadcast %127 : vector<1x128xf32> to vector<64x128xf32>
    %129 = arith.mulf %126, %128 : vector<64x128xf32>
    %130 = arith.addf %124, %129 : vector<64x128xf32>
    %c0_109 = arith.constant 0 : index
    %c2_110 = arith.constant 2 : index
    %c1_111 = arith.constant 1 : index
    %c16_112 = arith.constant 16 : index
    %131 = vector.load %arg0[%c0_109, %c2_110, %c1_111, %c16_112] : memref<2x6x10x160xf32, #tpu.memory_space<vmem>>, vector<2x4x8x128xf32>
    %132 = vector.shape_cast %131 : vector<2x4x8x128xf32> to vector<64x128xf32>
    %c22 = arith.constant 22 : index
    %c0_113 = arith.constant 0 : index
    %133 = vector.load %arg1[%c22, %c0_113] : memref<27x128xf32, #tpu.memory_space<vmem>>, vector<1x128xf32>
    %134 = vector.broadcast %133 : vector<1x128xf32> to vector<64x128xf32>
    %135 = arith.mulf %132, %134 : vector<64x128xf32>
    %136 = arith.addf %130, %135 : vector<64x128xf32>
    %c0_114 = arith.constant 0 : index
    %c2_115 = arith.constant 2 : index
    %c1_116 = arith.constant 1 : index
    %c32_117 = arith.constant 32 : index
    %137 = vector.load %arg0[%c0_114, %c2_115, %c1_116, %c32_117] : memref<2x6x10x160xf32, #tpu.memory_space<vmem>>, vector<2x4x8x128xf32>
    %138 = vector.shape_cast %137 : vector<2x4x8x128xf32> to vector<64x128xf32>
    %c23 = arith.constant 23 : index
    %c0_118 = arith.constant 0 : index
    %139 = vector.load %arg1[%c23, %c0_118] : memref<27x128xf32, #tpu.memory_space<vmem>>, vector<1x128xf32>
    %140 = vector.broadcast %139 : vector<1x128xf32> to vector<64x128xf32>
    %141 = arith.mulf %138, %140 : vector<64x128xf32>
    %142 = arith.addf %136, %141 : vector<64x128xf32>
    %c0_119 = arith.constant 0 : index
    %c2_120 = arith.constant 2 : index
    %c2_121 = arith.constant 2 : index
    %c0_122 = arith.constant 0 : index
    %143 = vector.load %arg0[%c0_119, %c2_120, %c2_121, %c0_122] : memref<2x6x10x160xf32, #tpu.memory_space<vmem>>, vector<2x4x8x128xf32>
    %144 = vector.shape_cast %143 : vector<2x4x8x128xf32> to vector<64x128xf32>
    %c24 = arith.constant 24 : index
    %c0_123 = arith.constant 0 : index
    %145 = vector.load %arg1[%c24, %c0_123] : memref<27x128xf32, #tpu.memory_space<vmem>>, vector<1x128xf32>
    %146 = vector.broadcast %145 : vector<1x128xf32> to vector<64x128xf32>
    %147 = arith.mulf %144, %146 : vector<64x128xf32>
    %148 = arith.addf %142, %147 : vector<64x128xf32>
    %c0_124 = arith.constant 0 : index
    %c2_125 = arith.constant 2 : index
    %c2_126 = arith.constant 2 : index
    %c16_127 = arith.constant 16 : index
    %149 = vector.load %arg0[%c0_124, %c2_125, %c2_126, %c16_127] : memref<2x6x10x160xf32, #tpu.memory_space<vmem>>, vector<2x4x8x128xf32>
    %150 = vector.shape_cast %149 : vector<2x4x8x128xf32> to vector<64x128xf32>
    %c25 = arith.constant 25 : index
    %c0_128 = arith.constant 0 : index
    %151 = vector.load %arg1[%c25, %c0_128] : memref<27x128xf32, #tpu.memory_space<vmem>>, vector<1x128xf32>
    %152 = vector.broadcast %151 : vector<1x128xf32> to vector<64x128xf32>
    %153 = arith.mulf %150, %152 : vector<64x128xf32>
    %154 = arith.addf %148, %153 : vector<64x128xf32>
    %c0_129 = arith.constant 0 : index
    %c2_130 = arith.constant 2 : index
    %c2_131 = arith.constant 2 : index
    %c32_132 = arith.constant 32 : index
    %155 = vector.load %arg0[%c0_129, %c2_130, %c2_131, %c32_132] : memref<2x6x10x160xf32, #tpu.memory_space<vmem>>, vector<2x4x8x128xf32>
    %156 = vector.shape_cast %155 : vector<2x4x8x128xf32> to vector<64x128xf32>
    %c26 = arith.constant 26 : index
    %c0_133 = arith.constant 0 : index
    %157 = vector.load %arg1[%c26, %c0_133] : memref<27x128xf32, #tpu.memory_space<vmem>>, vector<1x128xf32>
    %158 = vector.broadcast %157 : vector<1x128xf32> to vector<64x128xf32>
    %159 = arith.mulf %156, %158 : vector<64x128xf32>
    %160 = arith.addf %154, %159 : vector<64x128xf32>
    %161 = arith.truncf %160 : vector<64x128xf32> to vector<64x128xbf16>
    %c0_134 = arith.constant 0 : index
    %c0_135 = arith.constant 0 : index
    %162 = vector.load %arg2[%c0_134, %c0_135] : memref<128x128xbf16, #tpu.memory_space<vmem>>, vector<128x128xbf16>
    %cst = arith.constant dense<0.000000e+00> : vector<64x128xf32>
    %163 = tpu.matmul %161, %162, %cst {dimension_numbers = #tpu.dot_dimension_numbers<[1], [0], [0], [1], [0, 0, 1, 1], [], []>} : vector<64x128xbf16>, vector<128x128xbf16>, vector<64x128xf32> -> vector<64x128xf32>
    %cst_136 = arith.constant dense<0.000000e+00> : vector<128xf32>
    %164 = vector.multi_reduction <add>, %163, %cst_136 [0] : vector<64x128xf32> to vector<128xf32>
    %165 = vector.shape_cast %164 : vector<128xf32> to vector<1x128xf32>
    %166 = arith.mulf %163, %163 : vector<64x128xf32>
    %cst_137 = arith.constant dense<0.000000e+00> : vector<128xf32>
    %167 = vector.multi_reduction <add>, %166, %cst_137 [0] : vector<64x128xf32> to vector<128xf32>
    %168 = vector.shape_cast %167 : vector<128xf32> to vector<1x128xf32>
    %c64_i32 = arith.constant 64 : i32
    %169 = tpu.dynamic_rotate %165 by %c64_i32 dim 1 : vector<1x128xf32>, i32 -> vector<1x128xf32>
    %170 = arith.addf %165, %169 : vector<1x128xf32>
    %c64_i32_138 = arith.constant 64 : i32
    %171 = tpu.dynamic_rotate %168 by %c64_i32_138 dim 1 : vector<1x128xf32>, i32 -> vector<1x128xf32>
    %172 = arith.addf %168, %171 : vector<1x128xf32>
    %c32_i32 = arith.constant 32 : i32
    %173 = tpu.dynamic_rotate %170 by %c32_i32 dim 1 : vector<1x128xf32>, i32 -> vector<1x128xf32>
    %174 = arith.addf %170, %173 : vector<1x128xf32>
    %c32_i32_139 = arith.constant 32 : i32
    %175 = tpu.dynamic_rotate %172 by %c32_i32_139 dim 1 : vector<1x128xf32>, i32 -> vector<1x128xf32>
    %176 = arith.addf %172, %175 : vector<1x128xf32>
    %c16_i32 = arith.constant 16 : i32
    %177 = tpu.dynamic_rotate %174 by %c16_i32 dim 1 : vector<1x128xf32>, i32 -> vector<1x128xf32>
    %178 = arith.addf %174, %177 : vector<1x128xf32>
    %c16_i32_140 = arith.constant 16 : i32
    %179 = tpu.dynamic_rotate %176 by %c16_i32_140 dim 1 : vector<1x128xf32>, i32 -> vector<1x128xf32>
    %180 = arith.addf %176, %179 : vector<1x128xf32>
    %cst_141 = arith.constant 0.001953125 : f32
    %181 = vector.broadcast %cst_141 : f32 to vector<1x128xf32>
    %182 = arith.mulf %178, %181 : vector<1x128xf32>
    %cst_142 = arith.constant 0.001953125 : f32
    %183 = vector.broadcast %cst_142 : f32 to vector<1x128xf32>
    %184 = arith.mulf %180, %183 : vector<1x128xf32>
    %185 = arith.mulf %182, %182 : vector<1x128xf32>
    %186 = arith.subf %184, %185 : vector<1x128xf32>
    %c0_143 = arith.constant 0 : index
    %c0_144 = arith.constant 0 : index
    %187 = vector.load %arg3[%c0_143, %c0_144] : memref<1x128xf32, #tpu.memory_space<vmem>>, vector<1x128xf32>
    %cst_145 = arith.constant 9.99999974E-6 : f32
    %188 = vector.broadcast %cst_145 : f32 to vector<1x128xf32>
    %189 = arith.addf %186, %188 : vector<1x128xf32>
    %190 = math.rsqrt %189 : vector<1x128xf32>
    %191 = arith.mulf %187, %190 : vector<1x128xf32>
    %c0_146 = arith.constant 0 : index
    %c0_147 = arith.constant 0 : index
    %192 = vector.load %arg4[%c0_146, %c0_147] : memref<1x128xf32, #tpu.memory_space<vmem>>, vector<1x128xf32>
    %193 = arith.mulf %182, %191 : vector<1x128xf32>
    %194 = arith.subf %192, %193 : vector<1x128xf32>
    %195 = vector.broadcast %191 : vector<1x128xf32> to vector<64x128xf32>
    %196 = arith.mulf %163, %195 : vector<64x128xf32>
    %197 = vector.broadcast %194 : vector<1x128xf32> to vector<64x128xf32>
    %198 = arith.addf %196, %197 : vector<64x128xf32>
    %199 = arith.addf %198, %78 : vector<64x128xf32>
    %cst_148 = arith.constant 0.000000e+00 : f32
    %200 = vector.broadcast %cst_148 : f32 to vector<64x128xf32>
    %201 = arith.maximumf %199, %200 : vector<64x128xf32>
    %c0_149 = arith.constant 0 : index
    %c0_150 = arith.constant 0 : index
    %202 = vector.load %arg5[%c0_149, %c0_150] : memref<64x128xf32, #tpu.memory_space<vmem>>, vector<64x128xf32>
    tpu.vector_store %arg5[%c0_149, %c0_150], %201 {strides = array<i32>} : memref<64x128xf32, #tpu.memory_space<vmem>>, vector<64x128xf32>,
    return
  }
}

</mosaic_0001>

<llo_original>
// kernel: separable_conv_block_3d.1
$region0: #{separable_conv_block_3d.1}
  #allocation0 [shape = 'u32[]', space=smem, size = 0x4, offset = 0x4, fixed_abs, tag = 'smem constant byte address 0x4 - core index']
  #allocation1 [shape = 'u32[144,128]{1,0:T(1,128)}', space=vmem, size = 0x12000, scoped, tag = 'internal scratch']
  %s0 = inlined_call_operand.vmem [shape: f32[2,6,10,160], index: 0, kind: input, shape index: {}]
  %s1 = inlined_call_operand.vmem [shape: f32[27,128], index: 1, kind: input, shape index: {}]
  %s2 = inlined_call_operand.vmem [shape: bf16[128,128], index: 2, kind: input, shape index: {}]
  %s3 = inlined_call_operand.vmem [shape: f32[1,128], index: 3, kind: input, shape index: {}]
  %s4 = inlined_call_operand.vmem [shape: f32[1,128], index: 4, kind: input, shape index: {}]
  %s5 = inlined_call_operand.vmem [shape: f32[64,128], index: 5, kind: output, shape index: {}]
  %s6 = sld [smem:[#allocation0]]
  $region30: #{separable_conv_block_3d.1} parent=0
    _
  %s8 = ssub.s32 1, %s6
  %s9 = scalar_select 0, %s8, %s6
  // Predicated region
  $region2: #{separable_conv_block_3d.1} parent=0 // pred_check
    _
  $region3: #{separable_conv_block_3d.1} parent=0 // pred_check_branch
    %11 = sbr.rel (0) target = $region5
  $region4: #{separable_conv_block_3d.1} parent=0 // pred_region
    _
  $region5: #{separable_conv_block_3d.1} parent=0 // pred_fallthru
    _
  // Predicated region
  $region6: #{separable_conv_block_3d.1} parent=0 // pred_check
    _
  $region7: #{separable_conv_block_3d.1} parent=0 // pred_check_branch
    %13 = sbr.rel (0) target = $region9
  $region8: #{separable_conv_block_3d.1} parent=0 // pred_region
    _
  $region9: #{separable_conv_block_3d.1} parent=0 // pred_fallthru
    _
  // Predicated region
  $region10: #{separable_conv_block_3d.1} parent=0 // pred_check
    _
  $region11: #{separable_conv_block_3d.1} parent=0 // pred_check_branch
    %15 = sbr.rel (0) target = $region13
  $region12: #{separable_conv_block_3d.1} parent=0 // pred_region
    _
  $region13: #{separable_conv_block_3d.1} parent=0 // pred_fallthru
    _
  // Predicated region
  $region14: #{separable_conv_block_3d.1} parent=0 // pred_check
    _
  $region15: #{separable_conv_block_3d.1} parent=0 // pred_check_branch
    %17 = sbr.rel (0) target = $region17
  $region16: #{separable_conv_block_3d.1} parent=0 // pred_region
    _
  $region17: #{separable_conv_block_3d.1} parent=0 // pred_fallthru
    _
  // Predicated region
  $region18: #{separable_conv_block_3d.1} parent=0 // pred_check
    _
  $region19: #{separable_conv_block_3d.1} parent=0 // pred_check_branch
    %19 = sbr.rel (0) target = $region21
  $region20: #{separable_conv_block_3d.1} parent=0 // pred_region
    _
  $region21: #{separable_conv_block_3d.1} parent=0 // pred_fallthru
    _
  %v21 = vld [vmem:[%s0] sm:$0xff]
  %v22 = vld [vmem:[%s0 + $0x20] sm:$0xff]
  %v23 = vld [vmem:[%s0 + $0x40] sm:$0xff]
  %v24 = vld [vmem:[%s0 + $0x60] sm:$0xff]
  %v25 = vld [vmem:[%s0 + $0xc0] sm:$0xff]
  %v26 = vld [vmem:[%s0 + $0xe0] sm:$0xff]
  %v27 = vld [vmem:[%s0 + $0x100] sm:$0xff]
  %v28 = vld [vmem:[%s0 + $0x120] sm:$0xff]
  %v29 = vld [vmem:[%s1] sm:$0x1]
  %v30 = vlaneseq
  %v31 = vshrl.u32 %v30, 7
  %v32 = vsub.s32 0, %v31
  %v33 = vrot.slane %v29, %v32
  %v34 = vmul.f32 %v21, %v33
  %v35 = vmul.f32 %v22, %v33
  %v36 = vmul.f32 %v23, %v33
  %v37 = vmul.f32 %v24, %v33
  %v38 = vmul.f32 %v25, %v33
  %v39 = vmul.f32 %v26, %v33
  %v40 = vmul.f32 %v27, %v33
  %v41 = vmul.f32 %v28, %v33
  %v42 = vld [vmem:[%s0 + $0x8] sm:$0xff]
  %v43 = vld [vmem:[%s0 + $0x28] sm:$0xff]
  %v44 = vld [vmem:[%s0 + $0x48] sm:$0xff]
  %v45 = vld [vmem:[%s0 + $0x68] sm:$0xff]
  %v46 = vld [vmem:[%s0 + $0xc8] sm:$0xff]
  %v47 = vld [vmem:[%s0 + $0xe8] sm:$0xff]
  %v48 = vld [vmem:[%s0 + $0x108] sm:$0xff]
  %v49 = vld [vmem:[%s0 + $0x128] sm:$0xff]
  %v50 = vld [vmem:[%s1 + $0x1] sm:$0x1]
  %v51 = vlaneseq
  %v52 = vshrl.u32 %v51, 7
  %v53 = vsub.s32 0, %v52
  %v54 = vrot.slane %v50, %v53
  %56 = vrot.lane.b32.xlu0 %v54, 16
  %v57 = vpop.permute.xlu0 %56
  %v59 = vmul.f32 %v21, %v57
  %v60 = vmul.f32 %v42, %v57
  %v61 = vmul.f32 %v22, %v57
  %v62 = vmul.f32 %v43, %v57
  %v63 = vmul.f32 %v23, %v57
  %v64 = vmul.f32 %v44, %v57
  %v65 = vmul.f32 %v24, %v57
  %v66 = vmul.f32 %v45, %v57
  %v67 = vmul.f32 %v25, %v57
  %v68 = vmul.f32 %v46, %v57
  %v69 = vmul.f32 %v26, %v57
  %v70 = vmul.f32 %v47, %v57
  %v71 = vmul.f32 %v27, %v57
  %v72 = vmul.f32 %v48, %v57
  %v73 = vmul.f32 %v28, %v57
  %v74 = vmul.f32 %v49, %v57
  %91 = vrot.lane.b32.xlu0 %v59, 112
  %v92 = vpop.permute.xlu0 %91
  %93 = vrot.lane.b32.xlu0 %v60, 112
  %v94 = vpop.permute.xlu0 %93
  %95 = vrot.lane.b32.xlu0 %v61, 112
  %v96 = vpop.permute.xlu0 %95
  %97 = vrot.lane.b32.xlu0 %v62, 112
  %v98 = vpop.permute.xlu0 %97
  %99 = vrot.lane.b32.xlu0 %v63, 112
  %v100 = vpop.permute.xlu0 %99
  %101 = vrot.lane.b32.xlu0 %v64, 112
  %v102 = vpop.permute.xlu0 %101
  %103 = vrot.lane.b32.xlu0 %v65, 112
  %v104 = vpop.permute.xlu0 %103
  %105 = vrot.lane.b32.xlu0 %v66, 112
  %v106 = vpop.permute.xlu0 %105
  %107 = vrot.lane.b32.xlu0 %v67, 112
  %v108 = vpop.permute.xlu0 %107
  %109 = vrot.lane.b32.xlu0 %v68, 112
  %v110 = vpop.permute.xlu0 %109
  %111 = vrot.lane.b32.xlu0 %v69, 112
  %v112 = vpop.permute.xlu0 %111
  %113 = vrot.lane.b32.xlu0 %v70, 112
  %v114 = vpop.permute.xlu0 %113
  %115 = vrot.lane.b32.xlu0 %v71, 112
  %v116 = vpop.permute.xlu0 %115
  %117 = vrot.lane.b32.xlu0 %v72, 112
  %v118 = vpop.permute.xlu0 %117
  %119 = vrot.lane.b32.xlu0 %v73, 112
  %v120 = vpop.permute.xlu0 %119
  %121 = vrot.lane.b32.xlu0 %v74, 112
  %v122 = vpop.permute.xlu0 %121
  %vm123 = vcmask 916480
  %v124 = vsel %vm123, %v92, %v94
  %v125 = vsel %vm123, %v96, %v98
  %v126 = vsel %vm123, %v100, %v102
  %v127 = vsel %vm123, %v104, %v106
  %v128 = vsel %vm123, %v108, %v110
  %v129 = vsel %vm123, %v112, %v114
  %v130 = vsel %vm123, %v116, %v118
  %v131 = vsel %vm123, %v120, %v122
  %v140 = vadd.f32 %v34, %v124
  %v141 = vadd.f32 %v35, %v125
  %v142 = vadd.f32 %v36, %v126
  %v143 = vadd.f32 %v37, %v127
  %v144 = vadd.f32 %v38, %v128
  %v145 = vadd.f32 %v39, %v129
  %v146 = vadd.f32 %v40, %v130
  %v147 = vadd.f32 %v41, %v131
  %v148 = vld [vmem:[%s1 + $0x2] sm:$0x1]
  %v149 = vlaneseq
  %v150 = vshrl.u32 %v149, 7
  %v151 = vsub.s32 0, %v150
  %v152 = vrot.slane %v148, %v151
  %154 = vrot.lane.b32.xlu0 %v152, 32
  %v155 = vpop.permute.xlu0 %154
  %v157 = vmul.f32 %v21, %v155
  %v158 = vmul.f32 %v42, %v155
  %v159 = vmul.f32 %v22, %v155
  %v160 = vmul.f32 %v43, %v155
  %v161 = vmul.f32 %v23, %v155
  %v162 = vmul.f32 %v44, %v155
  %v163 = vmul.f32 %v24, %v155
  %v164 = vmul.f32 %v45, %v155
  %v165 = vmul.f32 %v25, %v155
  %v166 = vmul.f32 %v46, %v155
  %v167 = vmul.f32 %v26, %v155
  %v168 = vmul.f32 %v47, %v155
  %v169 = vmul.f32 %v27, %v155
  %v170 = vmul.f32 %v48, %v155
  %v171 = vmul.f32 %v28, %v155
  %v172 = vmul.f32 %v49, %v155
  %189 = vrot.lane.b32.xlu0 %v157, 96
  %v190 = vpop.permute.xlu0 %189
  %191 = vrot.lane.b32.xlu0 %v158, 96
  %v192 = vpop.permute.xlu0 %191
  %193 = vrot.lane.b32.xlu0 %v159, 96
  %v194 = vpop.permute.xlu0 %193
  %195 = vrot.lane.b32.xlu0 %v160, 96
  %v196 = vpop.permute.xlu0 %195
  %197 = vrot.lane.b32.xlu0 %v161, 96
  %v198 = vpop.permute.xlu0 %197
  %199 = vrot.lane.b32.xlu0 %v162, 96
  %v200 = vpop.permute.xlu0 %199
  %201 = vrot.lane.b32.xlu0 %v163, 96
  %v202 = vpop.permute.xlu0 %201
  %203 = vrot.lane.b32.xlu0 %v164, 96
  %v204 = vpop.permute.xlu0 %203
  %205 = vrot.lane.b32.xlu0 %v165, 96
  %v206 = vpop.permute.xlu0 %205
  %207 = vrot.lane.b32.xlu0 %v166, 96
  %v208 = vpop.permute.xlu0 %207
  %209 = vrot.lane.b32.xlu0 %v167, 96
  %v210 = vpop.permute.xlu0 %209
  %211 = vrot.lane.b32.xlu0 %v168, 96
  %v212 = vpop.permute.xlu0 %211
  %213 = vrot.lane.b32.xlu0 %v169, 96
  %v214 = vpop.permute.xlu0 %213
  %215 = vrot.lane.b32.xlu0 %v170, 96
  %v216 = vpop.permute.xlu0 %215
  %217 = vrot.lane.b32.xlu0 %v171, 96
  %v218 = vpop.permute.xlu0 %217
  %219 = vrot.lane.b32.xlu0 %v172, 96
  %v220 = vpop.permute.xlu0 %219
  %vm221 = vcmask 785408
  %v222 = vsel %vm221, %v190, %v192
  %v223 = vsel %vm221, %v194, %v196
  %v224 = vsel %vm221, %v198, %v200
  %v225 = vsel %vm221, %v202, %v204
  %v226 = vsel %vm221, %v206, %v208
  %v227 = vsel %vm221, %v210, %v212
  %v228 = vsel %vm221, %v214, %v216
  %v229 = vsel %vm221, %v218, %v220
  %v238 = vadd.f32 %v140, %v222
  %v239 = vadd.f32 %v141, %v223
  %v240 = vadd.f32 %v142, %v224
  %v241 = vadd.f32 %v143, %v225
  %v242 = vadd.f32 %v144, %v226
  %v243 = vadd.f32 %v145, %v227
  %v244 = vadd.f32 %v146, %v228
  %v245 = vadd.f32 %v147, %v229
  %v246 = vld [vmem:[%s0] sm:$0xfe]
  %v247 = vld [vmem:[%s0 + $0x10] sm:$0x1]
  %v248 = vld [vmem:[%s0 + $0x20] sm:$0xfe]
  %v249 = vld [vmem:[%s0 + $0x30] sm:$0x1]
  %v250 = vld [vmem:[%s0 + $0x40] sm:$0xfe]
  %v251 = vld [vmem:[%s0 + $0x50] sm:$0x1]
  %v252 = vld [vmem:[%s0 + $0x60] sm:$0xfe]
  %v253 = vld [vmem:[%s0 + $0x70] sm:$0x1]
  %v254 = vld [vmem:[%s0 + $0xc0] sm:$0xfe]
  %v255 = vld [vmem:[%s0 + $0xd0] sm:$0x1]
  %v256 = vld [vmem:[%s0 + $0xe0] sm:$0xfe]
  %v257 = vld [vmem:[%s0 + $0xf0] sm:$0x1]
  %v258 = vld [vmem:[%s0 + $0x100] sm:$0xfe]
  %v259 = vld [vmem:[%s0 + $0x110] sm:$0x1]
  %v260 = vld [vmem:[%s0 + $0x120] sm:$0xfe]
  %v261 = vld [vmem:[%s0 + $0x130] sm:$0x1]
  %vm278 = vcmask 1046528
  %v279 = vrot.slane %v246, 1
  %v280 = vrot.slane %v247, 1
  %v281 = vsel %vm278, %v279, %v280
  %v282 = vrot.slane %v248, 1
  %v283 = vrot.slane %v249, 1
  %v284 = vsel %vm278, %v282, %v283
  %v285 = vrot.slane %v250, 1
  %v286 = vrot.slane %v251, 1
  %v287 = vsel %vm278, %v285, %v286
  %v288 = vrot.slane %v252, 1
  %v289 = vrot.slane %v253, 1
  %v290 = vsel %vm278, %v288, %v289
  %v291 = vrot.slane %v254, 1
  %v292 = vrot.slane %v255, 1
  %v293 = vsel %vm278, %v291, %v292
  %v294 = vrot.slane %v256, 1
  %v295 = vrot.slane %v257, 1
  %v296 = vsel %vm278, %v294, %v295
  %v297 = vrot.slane %v258, 1
  %v298 = vrot.slane %v259, 1
  %v299 = vsel %vm278, %v297, %v298
  %v300 = vrot.slane %v260, 1
  %v301 = vrot.slane %v261, 1
  %v302 = vsel %vm278, %v300, %v301
  %v311 = vld [vmem:[%s1 + $0x3] sm:$0x1]
  %v312 = vlaneseq
  %v313 = vshrl.u32 %v312, 7
  %v314 = vsub.s32 0, %v313
  %v315 = vrot.slane %v311, %v314
  %v316 = vmul.f32 %v281, %v315
  %v317 = vmul.f32 %v284, %v315
  %v318 = vmul.f32 %v287, %v315
  %v319 = vmul.f32 %v290, %v315
  %v320 = vmul.f32 %v293, %v315
  %v321 = vmul.f32 %v296, %v315
  %v322 = vmul.f32 %v299, %v315
  %v323 = vmul.f32 %v302, %v315
  %v324 = vadd.f32 %v238, %v316
  %v325 = vadd.f32 %v239, %v317
  %v326 = vadd.f32 %v240, %v318
  %v327 = vadd.f32 %v241, %v319
  %v328 = vadd.f32 %v242, %v320
  %v329 = vadd.f32 %v243, %v321
  %v330 = vadd.f32 %v244, %v322
  %v331 = vadd.f32 %v245, %v323
  %v332 = vld [vmem:[%s0 + $0x8] sm:$0xfe]
  %v333 = vld [vmem:[%s0 + $0x18] sm:$0x1]
  %v334 = vld [vmem:[%s0 + $0x28] sm:$0xfe]
  %v335 = vld [vmem:[%s0 + $0x38] sm:$0x1]
  %v336 = vld [vmem:[%s0 + $0x48] sm:$0xfe]
  %v337 = vld [vmem:[%s0 + $0x58] sm:$0x1]
  %v338 = vld [vmem:[%s0 + $0x68] sm:$0xfe]
  %v339 = vld [vmem:[%s0 + $0x78] sm:$0x1]
  %v340 = vld [vmem:[%s0 + $0xc8] sm:$0xfe]
  %v341 = vld [vmem:[%s0 + $0xd8] sm:$0x1]
  %v342 = vld [vmem:[%s0 + $0xe8] sm:$0xfe]
  %v343 = vld [vmem:[%s0 + $0xf8] sm:$0x1]
  %v344 = vld [vmem:[%s0 + $0x108] sm:$0xfe]
  %v345 = vld [vmem:[%s0 + $0x118] sm:$0x1]
  %v346 = vld [vmem:[%s0 + $0x128] sm:$0xfe]
  %v347 = vld [vmem:[%s0 + $0x138] sm:$0x1]
  %v364 = vrot.slane %v332, 1
  %v365 = vrot.slane %v333, 1
  %v366 = vsel %vm278, %v364, %v365
  %v367 = vrot.slane %v334, 1
  %v368 = vrot.slane %v335, 1
  %v369 = vsel %vm278, %v367, %v368
  %v370 = vrot.slane %v336, 1
  %v371 = vrot.slane %v337, 1
  %v372 = vsel %vm278, %v370, %v371
  %v373 = vrot.slane %v338, 1
  %v374 = vrot.slane %v339, 1
  %v375 = vsel %vm278, %v373, %v374
  %v376 = vrot.slane %v340, 1
  %v377 = vrot.slane %v341, 1
  %v378 = vsel %vm278, %v376, %v377
  %v379 = vrot.slane %v342, 1
  %v380 = vrot.slane %v343, 1
  %v381 = vsel %vm278, %v379, %v380
  %v382 = vrot.slane %v344, 1
  %v383 = vrot.slane %v345, 1
  %v384 = vsel %vm278, %v382, %v383
  %v385 = vrot.slane %v346, 1
  %v386 = vrot.slane %v347, 1
  %v387 = vsel %vm278, %v385, %v386
  %v396 = vld [vmem:[%s1 + $0x4] sm:$0x1]
  %v397 = vlaneseq
  %v398 = vshrl.u32 %v397, 7
  %v399 = vsub.s32 0, %v398
  %v400 = vrot.slane %v396, %v399
  %402 = vrot.lane.b32.xlu0 %v400, 16
  %v403 = vpop.permute.xlu0 %402
  %v405 = vmul.f32 %v281, %v403
  %v406 = vmul.f32 %v366, %v403
  %v407 = vmul.f32 %v284, %v403
  %v408 = vmul.f32 %v369, %v403
  %v409 = vmul.f32 %v287, %v403
  %v410 = vmul.f32 %v372, %v403
  %v411 = vmul.f32 %v290, %v403
  %v412 = vmul.f32 %v375, %v403
  %v413 = vmul.f32 %v293, %v403
  %v414 = vmul.f32 %v378, %v403
  %v415 = vmul.f32 %v296, %v403
  %v416 = vmul.f32 %v381, %v403
  %v417 = vmul.f32 %v299, %v403
  %v418 = vmul.f32 %v384, %v403
  %v419 = vmul.f32 %v302, %v403
  %v420 = vmul.f32 %v387, %v403
  %437 = vrot.lane.b32.xlu0 %v405, 112
  %v438 = vpop.permute.xlu0 %437
  %439 = vrot.lane.b32.xlu0 %v406, 112
  %v440 = vpop.permute.xlu0 %439
  %441 = vrot.lane.b32.xlu0 %v407, 112
  %v442 = vpop.permute.xlu0 %441
  %443 = vrot.lane.b32.xlu0 %v408, 112
  %v444 = vpop.permute.xlu0 %443
  %445 = vrot.lane.b32.xlu0 %v409, 112
  %v446 = vpop.permute.xlu0 %445
  %447 = vrot.lane.b32.xlu0 %v410, 112
  %v448 = vpop.permute.xlu0 %447
  %449 = vrot.lane.b32.xlu0 %v411, 112
  %v450 = vpop.permute.xlu0 %449
  %451 = vrot.lane.b32.xlu0 %v412, 112
  %v452 = vpop.permute.xlu0 %451
  %453 = vrot.lane.b32.xlu0 %v413, 112
  %v454 = vpop.permute.xlu0 %453
  %455 = vrot.lane.b32.xlu0 %v414, 112
  %v456 = vpop.permute.xlu0 %455
  %457 = vrot.lane.b32.xlu0 %v415, 112
  %v458 = vpop.permute.xlu0 %457
  %459 = vrot.lane.b32.xlu0 %v416, 112
  %v460 = vpop.permute.xlu0 %459
  %461 = vrot.lane.b32.xlu0 %v417, 112
  %v462 = vpop.permute.xlu0 %461
  %463 = vrot.lane.b32.xlu0 %v418, 112
  %v464 = vpop.permute.xlu0 %463
  %465 = vrot.lane.b32.xlu0 %v419, 112
  %v466 = vpop.permute.xlu0 %465
  %467 = vrot.lane.b32.xlu0 %v420, 112
  %v468 = vpop.permute.xlu0 %467
  %v469 = vsel %vm123, %v438, %v440
  %v470 = vsel %vm123, %v442, %v444
  %v471 = vsel %vm123, %v446, %v448
  %v472 = vsel %vm123, %v450, %v452
  %v473 = vsel %vm123, %v454, %v456
  %v474 = vsel %vm123, %v458, %v460
  %v475 = vsel %vm123, %v462, %v464
  %v476 = vsel %vm123, %v466, %v468
  %v485 = vadd.f32 %v324, %v469
  %v486 = vadd.f32 %v325, %v470
  %v487 = vadd.f32 %v326, %v471
  %v488 = vadd.f32 %v327, %v472
  %v489 = vadd.f32 %v328, %v473
  %v490 = vadd.f32 %v329, %v474
  %v491 = vadd.f32 %v330, %v475
  %v492 = vadd.f32 %v331, %v476
  %v493 = vld [vmem:[%s1 + $0x5] sm:$0x1]
  %v494 = vlaneseq
  %v495 = vshrl.u32 %v494, 7
  %v496 = vsub.s32 0, %v495
  %v497 = vrot.slane %v493, %v496
  %499 = vrot.lane.b32.xlu0 %v497, 32
  %v500 = vpop.permute.xlu0 %499
  %v502 = vmul.f32 %v281, %v500
  %v503 = vmul.f32 %v366, %v500
  %v504 = vmul.f32 %v284, %v500
  %v505 = vmul.f32 %v369, %v500
  %v506 = vmul.f32 %v287, %v500
  %v507 = vmul.f32 %v372, %v500
  %v508 = vmul.f32 %v290, %v500
  %v509 = vmul.f32 %v375, %v500
  %v510 = vmul.f32 %v293, %v500
  %v511 = vmul.f32 %v378, %v500
  %v512 = vmul.f32 %v296, %v500
  %v513 = vmul.f32 %v381, %v500
  %v514 = vmul.f32 %v299, %v500
  %v515 = vmul.f32 %v384, %v500
  %v516 = vmul.f32 %v302, %v500
  %v517 = vmul.f32 %v387, %v500
  %534 = vrot.lane.b32.xlu0 %v502, 96
  %v535 = vpop.permute.xlu0 %534
  %536 = vrot.lane.b32.xlu0 %v503, 96
  %v537 = vpop.permute.xlu0 %536
  %538 = vrot.lane.b32.xlu0 %v504, 96
  %v539 = vpop.permute.xlu0 %538
  %540 = vrot.lane.b32.xlu0 %v505, 96
  %v541 = vpop.permute.xlu0 %540
  %542 = vrot.lane.b32.xlu0 %v506, 96
  %v543 = vpop.permute.xlu0 %542
  %544 = vrot.lane.b32.xlu0 %v507, 96
  %v545 = vpop.permute.xlu0 %544
  %546 = vrot.lane.b32.xlu0 %v508, 96
  %v547 = vpop.permute.xlu0 %546
  %548 = vrot.lane.b32.xlu0 %v509, 96
  %v549 = vpop.permute.xlu0 %548
  %550 = vrot.lane.b32.xlu0 %v510, 96
  %v551 = vpop.permute.xlu0 %550
  %552 = vrot.lane.b32.xlu0 %v511, 96
  %v553 = vpop.permute.xlu0 %552
  %554 = vrot.lane.b32.xlu0 %v512, 96
  %v555 = vpop.permute.xlu0 %554
  %556 = vrot.lane.b32.xlu0 %v513, 96
  %v557 = vpop.permute.xlu0 %556
  %558 = vrot.lane.b32.xlu0 %v514, 96
  %v559 = vpop.permute.xlu0 %558
  %560 = vrot.lane.b32.xlu0 %v515, 96
  %v561 = vpop.permute.xlu0 %560
  %562 = vrot.lane.b32.xlu0 %v516, 96
  %v563 = vpop.permute.xlu0 %562
  %564 = vrot.lane.b32.xlu0 %v517, 96
  %v565 = vpop.permute.xlu0 %564
  %v566 = vsel %vm221, %v535, %v537
  %v567 = vsel %vm221, %v539, %v541
  %v568 = vsel %vm221, %v543, %v545
  %v569 = vsel %vm221, %v547, %v549
  %v570 = vsel %vm221, %v551, %v553
  %v571 = vsel %vm221, %v555, %v557
  %v572 = vsel %vm221, %v559, %v561
  %v573 = vsel %vm221, %v563, %v565
  %v582 = vadd.f32 %v485, %v566
  %v583 = vadd.f32 %v486, %v567
  %v584 = vadd.f32 %v487, %v568
  %v585 = vadd.f32 %v488, %v569
  %v586 = vadd.f32 %v489, %v570
  %v587 = vadd.f32 %v490, %v571
  %v588 = vadd.f32 %v491, %v572
  %v589 = vadd.f32 %v492, %v573
  %v590 = vld [vmem:[%s0] sm:$0xfc]
  %v591 = vld [vmem:[%s0 + $0x10] sm:$0x3]
  %v592 = vld [vmem:[%s0 + $0x20] sm:$0xfc]
  %v593 = vld [vmem:[%s0 + $0x30] sm:$0x3]
  %v594 = vld [vmem:[%s0 + $0x40] sm:$0xfc]
  %v595 = vld [vmem:[%s0 + $0x50] sm:$0x3]
  %v596 = vld [vmem:[%s0 + $0x60] sm:$0xfc]
  %v597 = vld [vmem:[%s0 + $0x70] sm:$0x3]
  %v598 = vld [vmem:[%s0 + $0xc0] sm:$0xfc]
  %v599 = vld [vmem:[%s0 + $0xd0] sm:$0x3]
  %v600 = vld [vmem:[%s0 + $0xe0] sm:$0xfc]
  %v601 = vld [vmem:[%s0 + $0xf0] sm:$0x3]
  %v602 = vld [vmem:[%s0 + $0x100] sm:$0xfc]
  %v603 = vld [vmem:[%s0 + $0x110] sm:$0x3]
  %v604 = vld [vmem:[%s0 + $0x120] sm:$0xfc]
  %v605 = vld [vmem:[%s0 + $0x130] sm:$0x3]
  %vm622 = vcmask 1045504
  %v623 = vrot.slane %v590, 2
  %v624 = vrot.slane %v591, 2
  %v625 = vsel %vm622, %v623, %v624
  %v626 = vrot.slane %v592, 2
  %v627 = vrot.slane %v593, 2
  %v628 = vsel %vm622, %v626, %v627
  %v629 = vrot.slane %v594, 2
  %v630 = vrot.slane %v595, 2
  %v631 = vsel %vm622, %v629, %v630
  %v632 = vrot.slane %v596, 2
  %v633 = vrot.slane %v597, 2
  %v634 = vsel %vm622, %v632, %v633
  %v635 = vrot.slane %v598, 2
  %v636 = vrot.slane %v599, 2
  %v637 = vsel %vm622, %v635, %v636
  %v638 = vrot.slane %v600, 2
  %v639 = vrot.slane %v601, 2
  %v640 = vsel %vm622, %v638, %v639
  %v641 = vrot.slane %v602, 2
  %v642 = vrot.slane %v603, 2
  %v643 = vsel %vm622, %v641, %v642
  %v644 = vrot.slane %v604, 2
  %v645 = vrot.slane %v605, 2
  %v646 = vsel %vm622, %v644, %v645
  %v655 = vld [vmem:[%s1 + $0x6] sm:$0x1]
  %v656 = vlaneseq
  %v657 = vshrl.u32 %v656, 7
  %v658 = vsub.s32 0, %v657
  %v659 = vrot.slane %v655, %v658
  %v660 = vmul.f32 %v625, %v659
  %v661 = vmul.f32 %v628, %v659
  %v662 = vmul.f32 %v631, %v659
  %v663 = vmul.f32 %v634, %v659
  %v664 = vmul.f32 %v637, %v659
  %v665 = vmul.f32 %v640, %v659
  %v666 = vmul.f32 %v643, %v659
  %v667 = vmul.f32 %v646, %v659
  %v668 = vadd.f32 %v582, %v660
  %v669 = vadd.f32 %v583, %v661
  %v670 = vadd.f32 %v584, %v662
  %v671 = vadd.f32 %v585, %v663
  %v672 = vadd.f32 %v586, %v664
  %v673 = vadd.f32 %v587, %v665
  %v674 = vadd.f32 %v588, %v666
  %v675 = vadd.f32 %v589, %v667
  %v676 = vld [vmem:[%s0 + $0x8] sm:$0xfc]
  %v677 = vld [vmem:[%s0 + $0x18] sm:$0x3]
  %v678 = vld [vmem:[%s0 + $0x28] sm:$0xfc]
  %v679 = vld [vmem:[%s0 + $0x38] sm:$0x3]
  %v680 = vld [vmem:[%s0 + $0x48] sm:$0xfc]
  %v681 = vld [vmem:[%s0 + $0x58] sm:$0x3]
  %v682 = vld [vmem:[%s0 + $0x68] sm:$0xfc]
  %v683 = vld [vmem:[%s0 + $0x78] sm:$0x3]
  %v684 = vld [vmem:[%s0 + $0xc8] sm:$0xfc]
  %v685 = vld [vmem:[%s0 + $0xd8] sm:$0x3]
  %v686 = vld [vmem:[%s0 + $0xe8] sm:$0xfc]
  %v687 = vld [vmem:[%s0 + $0xf8] sm:$0x3]
  %v688 = vld [vmem:[%s0 + $0x108] sm:$0xfc]
  %v689 = vld [vmem:[%s0 + $0x118] sm:$0x3]
  %v690 = vld [vmem:[%s0 + $0x128] sm:$0xfc]
  %v691 = vld [vmem:[%s0 + $0x138] sm:$0x3]
  %v708 = vrot.slane %v676, 2
  %v709 = vrot.slane %v677, 2
  %v710 = vsel %vm622, %v708, %v709
  %v711 = vrot.slane %v678, 2
  %v712 = vrot.slane %v679, 2
  %v713 = vsel %vm622, %v711, %v712
  %v714 = vrot.slane %v680, 2
  %v715 = vrot.slane %v681, 2
  %v716 = vsel %vm622, %v714, %v715
  %v717 = vrot.slane %v682, 2
  %v718 = vrot.slane %v683, 2
  %v719 = vsel %vm622, %v717, %v718
  %v720 = vrot.slane %v684, 2
  %v721 = vrot.slane %v685, 2
  %v722 = vsel %vm622, %v720, %v721
  %v723 = vrot.slane %v686, 2
  %v724 = vrot.slane %v687, 2
  %v725 = vsel %vm622, %v723, %v724
  %v726 = vrot.slane %v688, 2
  %v727 = vrot.slane %v689, 2
  %v728 = vsel %vm622, %v726, %v727
  %v729 = vrot.slane %v690, 2
  %v730 = vrot.slane %v691, 2
  %v731 = vsel %vm622, %v729, %v730
  %v740 = vld [vmem:[%s1 + $0x7] sm:$0x1]
  %v741 = vlaneseq
  %v742 = vshrl.u32 %v741, 7
  %v743 = vsub.s32 0, %v742
  %v744 = vrot.slane %v740, %v743
  %746 = vrot.lane.b32.xlu0 %v744, 16
  %v747 = vpop.permute.xlu0 %746
  %v749 = vmul.f32 %v625, %v747
  %v750 = vmul.f32 %v710, %v747
  %v751 = vmul.f32 %v628, %v747
  %v752 = vmul.f32 %v713, %v747
  %v753 = vmul.f32 %v631, %v747
  %v754 = vmul.f32 %v716, %v747
  %v755 = vmul.f32 %v634, %v747
  %v756 = vmul.f32 %v719, %v747
  %v757 = vmul.f32 %v637, %v747
  %v758 = vmul.f32 %v722, %v747
  %v759 = vmul.f32 %v640, %v747
  %v760 = vmul.f32 %v725, %v747
  %v761 = vmul.f32 %v643, %v747
  %v762 = vmul.f32 %v728, %v747
  %v763 = vmul.f32 %v646, %v747
  %v764 = vmul.f32 %v731, %v747
  %781 = vrot.lane.b32.xlu0 %v749, 112
  %v782 = vpop.permute.xlu0 %781
  %783 = vrot.lane.b32.xlu0 %v750, 112
  %v784 = vpop.permute.xlu0 %783
  %785 = vrot.lane.b32.xlu0 %v751, 112
  %v786 = vpop.permute.xlu0 %785
  %787 = vrot.lane.b32.xlu0 %v752, 112
  %v788 = vpop.permute.xlu0 %787
  %789 = vrot.lane.b32.xlu0 %v753, 112
  %v790 = vpop.permute.xlu0 %789
  %791 = vrot.lane.b32.xlu0 %v754, 112
  %v792 = vpop.permute.xlu0 %791
  %793 = vrot.lane.b32.xlu0 %v755, 112
  %v794 = vpop.permute.xlu0 %793
  %795 = vrot.lane.b32.xlu0 %v756, 112
  %v796 = vpop.permute.xlu0 %795
  %797 = vrot.lane.b32.xlu0 %v757, 112
  %v798 = vpop.permute.xlu0 %797
  %799 = vrot.lane.b32.xlu0 %v758, 112
  %v800 = vpop.permute.xlu0 %799
  %801 = vrot.lane.b32.xlu0 %v759, 112
  %v802 = vpop.permute.xlu0 %801
  %803 = vrot.lane.b32.xlu0 %v760, 112
  %v804 = vpop.permute.xlu0 %803
  %805 = vrot.lane.b32.xlu0 %v761, 112
  %v806 = vpop.permute.xlu0 %805
  %807 = vrot.lane.b32.xlu0 %v762, 112
  %v808 = vpop.permute.xlu0 %807
  %809 = vrot.lane.b32.xlu0 %v763, 112
  %v810 = vpop.permute.xlu0 %809
  %811 = vrot.lane.b32.xlu0 %v764, 112
  %v812 = vpop.permute.xlu0 %811
  %v813 = vsel %vm123, %v782, %v784
  %v814 = vsel %vm123, %v786, %v788
  %v815 = vsel %vm123, %v790, %v792
  %v816 = vsel %vm123, %v794, %v796
  %v817 = vsel %vm123, %v798, %v800
  %v818 = vsel %vm123, %v802, %v804
  %v819 = vsel %vm123, %v806, %v808
  %v820 = vsel %vm123, %v810, %v812
  %v829 = vadd.f32 %v668, %v813
  %v830 = vadd.f32 %v669, %v814
  %v831 = vadd.f32 %v670, %v815
  %v832 = vadd.f32 %v671, %v816
  %v833 = vadd.f32 %v672, %v817
  %v834 = vadd.f32 %v673, %v818
  %v835 = vadd.f32 %v674, %v819
  %v836 = vadd.f32 %v675, %v820
  %v837 = vld [vmem:[%s1 + $0x8] sm:$0x1]
  %v838 = vlaneseq
  %v839 = vshrl.u32 %v838, 7
  %v840 = vsub.s32 0, %v839
  %v841 = vrot.slane %v837, %v840
  %843 = vrot.lane.b32.xlu0 %v841, 32
  %v844 = vpop.permute.xlu0 %843
  %v846 = vmul.f32 %v625, %v844
  %v847 = vmul.f32 %v710, %v844
  %v848 = vmul.f32 %v628, %v844
  %v849 = vmul.f32 %v713, %v844
  %v850 = vmul.f32 %v631, %v844
  %v851 = vmul.f32 %v716, %v844
  %v852 = vmul.f32 %v634, %v844
  %v853 = vmul.f32 %v719, %v844
  %v854 = vmul.f32 %v637, %v844
  %v855 = vmul.f32 %v722, %v844
  %v856 = vmul.f32 %v640, %v844
  %v857 = vmul.f32 %v725, %v844
  %v858 = vmul.f32 %v643, %v844
  %v859 = vmul.f32 %v728, %v844
  %v860 = vmul.f32 %v646, %v844
  %v861 = vmul.f32 %v731, %v844
  %878 = vrot.lane.b32.xlu0 %v846, 96
  %v879 = vpop.permute.xlu0 %878
  %880 = vrot.lane.b32.xlu0 %v847, 96
  %v881 = vpop.permute.xlu0 %880
  %882 = vrot.lane.b32.xlu0 %v848, 96
  %v883 = vpop.permute.xlu0 %882
  %884 = vrot.lane.b32.xlu0 %v849, 96
  %v885 = vpop.permute.xlu0 %884
  %886 = vrot.lane.b32.xlu0 %v850, 96
  %v887 = vpop.permute.xlu0 %886
  %888 = vrot.lane.b32.xlu0 %v851, 96
  %v889 = vpop.permute.xlu0 %888
  %890 = vrot.lane.b32.xlu0 %v852, 96
  %v891 = vpop.permute.xlu0 %890
  %892 = vrot.lane.b32.xlu0 %v853, 96
  %v893 = vpop.permute.xlu0 %892
  %894 = vrot.lane.b32.xlu0 %v854, 96
  %v895 = vpop.permute.xlu0 %894
  %896 = vrot.lane.b32.xlu0 %v855, 96
  %v897 = vpop.permute.xlu0 %896
  %898 = vrot.lane.b32.xlu0 %v856, 96
  %v899 = vpop.permute.xlu0 %898
  %900 = vrot.lane.b32.xlu0 %v857, 96
  %v901 = vpop.permute.xlu0 %900
  %902 = vrot.lane.b32.xlu0 %v858, 96
  %v903 = vpop.permute.xlu0 %902
  %904 = vrot.lane.b32.xlu0 %v859, 96
  %v905 = vpop.permute.xlu0 %904
  %906 = vrot.lane.b32.xlu0 %v860, 96
  %v907 = vpop.permute.xlu0 %906
  %908 = vrot.lane.b32.xlu0 %v861, 96
  %v909 = vpop.permute.xlu0 %908
  %v910 = vsel %vm221, %v879, %v881
  %v911 = vsel %vm221, %v883, %v885
  %v912 = vsel %vm221, %v887, %v889
  %v913 = vsel %vm221, %v891, %v893
  %v914 = vsel %vm221, %v895, %v897
  %v915 = vsel %vm221, %v899, %v901
  %v916 = vsel %vm221, %v903, %v905
  %v917 = vsel %vm221, %v907, %v909
  %v926 = vadd.f32 %v829, %v910
  %v927 = vadd.f32 %v830, %v911
  %v928 = vadd.f32 %v831, %v912
  %v929 = vadd.f32 %v832, %v913
  %v930 = vadd.f32 %v833, %v914
  %v931 = vadd.f32 %v834, %v915
  %v932 = vadd.f32 %v835, %v916
  %v933 = vadd.f32 %v836, %v917
  %s934 = scalar_lea.vmem %s0, 32
  %v935 = vld [vmem:[%s934] sm:$0xff]
  %v936 = vld [vmem:[%s934 + $0x20] sm:$0xff]
  %v937 = vld [vmem:[%s934 + $0x40] sm:$0xff]
  %v938 = vld [vmem:[%s934 + $0x60] sm:$0xff]
  %v939 = vld [vmem:[%s934 + $0xc0] sm:$0xff]
  %v940 = vld [vmem:[%s934 + $0xe0] sm:$0xff]
  %v941 = vld [vmem:[%s934 + $0x100] sm:$0xff]
  %v942 = vld [vmem:[%s934 + $0x120] sm:$0xff]
  %v943 = vld [vmem:[%s1 + $0x9] sm:$0x1]
  %v944 = vlaneseq
  %v945 = vshrl.u32 %v944, 7
  %v946 = vsub.s32 0, %v945
  %v947 = vrot.slane %v943, %v946
  %v948 = vmul.f32 %v935, %v947
  %v949 = vmul.f32 %v936, %v947
  %v950 = vmul.f32 %v937, %v947
  %v951 = vmul.f32 %v938, %v947
  %v952 = vmul.f32 %v939, %v947
  %v953 = vmul.f32 %v940, %v947
  %v954 = vmul.f32 %v941, %v947
  %v955 = vmul.f32 %v942, %v947
  %v956 = vadd.f32 %v926, %v948
  %v957 = vadd.f32 %v927, %v949
  %v958 = vadd.f32 %v928, %v950
  %v959 = vadd.f32 %v929, %v951
  %v960 = vadd.f32 %v930, %v952
  %v961 = vadd.f32 %v931, %v953
  %v962 = vadd.f32 %v932, %v954
  %v963 = vadd.f32 %v933, %v955
  %v964 = vld [vmem:[%s934 + $0x8] sm:$0xff]
  %v965 = vld [vmem:[%s934 + $0x28] sm:$0xff]
  %v966 = vld [vmem:[%s934 + $0x48] sm:$0xff]
  %v967 = vld [vmem:[%s934 + $0x68] sm:$0xff]
  %v968 = vld [vmem:[%s934 + $0xc8] sm:$0xff]
  %v969 = vld [vmem:[%s934 + $0xe8] sm:$0xff]
  %v970 = vld [vmem:[%s934 + $0x108] sm:$0xff]
  %v971 = vld [vmem:[%s934 + $0x128] sm:$0xff]
  %v972 = vld [vmem:[%s1 + $0xa] sm:$0x1]
  %v973 = vlaneseq
  %v974 = vshrl.u32 %v973, 7
  %v975 = vsub.s32 0, %v974
  %v976 = vrot.slane %v972, %v975
  %978 = vrot.lane.b32.xlu0 %v976, 16
  %v979 = vpop.permute.xlu0 %978
  %v981 = vmul.f32 %v935, %v979
  %v982 = vmul.f32 %v964, %v979
  %v983 = vmul.f32 %v936, %v979
  %v984 = vmul.f32 %v965, %v979
  %v985 = vmul.f32 %v937, %v979
  %v986 = vmul.f32 %v966, %v979
  %v987 = vmul.f32 %v938, %v979
  %v988 = vmul.f32 %v967, %v979
  %v989 = vmul.f32 %v939, %v979
  %v990 = vmul.f32 %v968, %v979
  %v991 = vmul.f32 %v940, %v979
  %v992 = vmul.f32 %v969, %v979
  %v993 = vmul.f32 %v941, %v979
  %v994 = vmul.f32 %v970, %v979
  %v995 = vmul.f32 %v942, %v979
  %v996 = vmul.f32 %v971, %v979
  %1013 = vrot.lane.b32.xlu0 %v981, 112
  %v1014 = vpop.permute.xlu0 %1013
  %1015 = vrot.lane.b32.xlu0 %v982, 112
  %v1016 = vpop.permute.xlu0 %1015
  %1017 = vrot.lane.b32.xlu0 %v983, 112
  %v1018 = vpop.permute.xlu0 %1017
  %1019 = vrot.lane.b32.xlu0 %v984, 112
  %v1020 = vpop.permute.xlu0 %1019
  %1021 = vrot.lane.b32.xlu0 %v985, 112
  %v1022 = vpop.permute.xlu0 %1021
  %1023 = vrot.lane.b32.xlu0 %v986, 112
  %v1024 = vpop.permute.xlu0 %1023
  %1025 = vrot.lane.b32.xlu0 %v987, 112
  %v1026 = vpop.permute.xlu0 %1025
  %1027 = vrot.lane.b32.xlu0 %v988, 112
  %v1028 = vpop.permute.xlu0 %1027
  %1029 = vrot.lane.b32.xlu0 %v989, 112
  %v1030 = vpop.permute.xlu0 %1029
  %1031 = vrot.lane.b32.xlu0 %v990, 112
  %v1032 = vpop.permute.xlu0 %1031
  %1033 = vrot.lane.b32.xlu0 %v991, 112
  %v1034 = vpop.permute.xlu0 %1033
  %1035 = vrot.lane.b32.xlu0 %v992, 112
  %v1036 = vpop.permute.xlu0 %1035
  %1037 = vrot.lane.b32.xlu0 %v993, 112
  %v1038 = vpop.permute.xlu0 %1037
  %1039 = vrot.lane.b32.xlu0 %v994, 112
  %v1040 = vpop.permute.xlu0 %1039
  %1041 = vrot.lane.b32.xlu0 %v995, 112
  %v1042 = vpop.permute.xlu0 %1041
  %1043 = vrot.lane.b32.xlu0 %v996, 112
  %v1044 = vpop.permute.xlu0 %1043
  %v1045 = vsel %vm123, %v1014, %v1016
  %v1046 = vsel %vm123, %v1018, %v1020
  %v1047 = vsel %vm123, %v1022, %v1024
  %v1048 = vsel %vm123, %v1026, %v1028
  %v1049 = vsel %vm123, %v1030, %v1032
  %v1050 = vsel %vm123, %v1034, %v1036
  %v1051 = vsel %vm123, %v1038, %v1040
  %v1052 = vsel %vm123, %v1042, %v1044
  %v1061 = vadd.f32 %v956, %v1045
  %v1062 = vadd.f32 %v957, %v1046
  %v1063 = vadd.f32 %v958, %v1047
  %v1064 = vadd.f32 %v959, %v1048
  %v1065 = vadd.f32 %v960, %v1049
  %v1066 = vadd.f32 %v961, %v1050
  %v1067 = vadd.f32 %v962, %v1051
  %v1068 = vadd.f32 %v963, %v1052
  %v1069 = vld [vmem:[%s1 + $0xb] sm:$0x1]
  %v1070 = vlaneseq
  %v1071 = vshrl.u32 %v1070, 7
  %v1072 = vsub.s32 0, %v1071
  %v1073 = vrot.slane %v1069, %v1072
  %1075 = vrot.lane.b32.xlu0 %v1073, 32
  %v1076 = vpop.permute.xlu0 %1075
  %v1078 = vmul.f32 %v935, %v1076
  %v1079 = vmul.f32 %v964, %v1076
  %v1080 = vmul.f32 %v936, %v1076
  %v1081 = vmul.f32 %v965, %v1076
  %v1082 = vmul.f32 %v937, %v1076
  %v1083 = vmul.f32 %v966, %v1076
  %v1084 = vmul.f32 %v938, %v1076
  %v1085 = vmul.f32 %v967, %v1076
  %v1086 = vmul.f32 %v939, %v1076
  %v1087 = vmul.f32 %v968, %v1076
  %v1088 = vmul.f32 %v940, %v1076
  %v1089 = vmul.f32 %v969, %v1076
  %v1090 = vmul.f32 %v941, %v1076
  %v1091 = vmul.f32 %v970, %v1076
  %v1092 = vmul.f32 %v942, %v1076
  %v1093 = vmul.f32 %v971, %v1076
  %1110 = vrot.lane.b32.xlu0 %v1078, 96
  %v1111 = vpop.permute.xlu0 %1110
  %1112 = vrot.lane.b32.xlu0 %v1079, 96
  %v1113 = vpop.permute.xlu0 %1112
  %1114 = vrot.lane.b32.xlu0 %v1080, 96
  %v1115 = vpop.permute.xlu0 %1114
  %1116 = vrot.lane.b32.xlu0 %v1081, 96
  %v1117 = vpop.permute.xlu0 %1116
  %1118 = vrot.lane.b32.xlu0 %v1082, 96
  %v1119 = vpop.permute.xlu0 %1118
  %1120 = vrot.lane.b32.xlu0 %v1083, 96
  %v1121 = vpop.permute.xlu0 %1120
  %1122 = vrot.lane.b32.xlu0 %v1084, 96
  %v1123 = vpop.permute.xlu0 %1122
  %1124 = vrot.lane.b32.xlu0 %v1085, 96
  %v1125 = vpop.permute.xlu0 %1124
  %1126 = vrot.lane.b32.xlu0 %v1086, 96
  %v1127 = vpop.permute.xlu0 %1126
  %1128 = vrot.lane.b32.xlu0 %v1087, 96
  %v1129 = vpop.permute.xlu0 %1128
  %1130 = vrot.lane.b32.xlu0 %v1088, 96
  %v1131 = vpop.permute.xlu0 %1130
  %1132 = vrot.lane.b32.xlu0 %v1089, 96
  %v1133 = vpop.permute.xlu0 %1132
  %1134 = vrot.lane.b32.xlu0 %v1090, 96
  %v1135 = vpop.permute.xlu0 %1134
  %1136 = vrot.lane.b32.xlu0 %v1091, 96
  %v1137 = vpop.permute.xlu0 %1136
  %1138 = vrot.lane.b32.xlu0 %v1092, 96
  %v1139 = vpop.permute.xlu0 %1138
  %1140 = vrot.lane.b32.xlu0 %v1093, 96
  %v1141 = vpop.permute.xlu0 %1140
  %v1142 = vsel %vm221, %v1111, %v1113
  %v1143 = vsel %vm221, %v1115, %v1117
  %v1144 = vsel %vm221, %v1119, %v1121
  %v1145 = vsel %vm221, %v1123, %v1125
  %v1146 = vsel %vm221, %v1127, %v1129
  %v1147 = vsel %vm221, %v1131, %v1133
  %v1148 = vsel %vm221, %v1135, %v1137
  %v1149 = vsel %vm221, %v1139, %v1141
  %v1158 = vadd.f32 %v1061, %v1142
  %v1159 = vadd.f32 %v1062, %v1143
  %v1160 = vadd.f32 %v1063, %v1144
  %v1161 = vadd.f32 %v1064, %v1145
  %v1162 = vadd.f32 %v1065, %v1146
  %v1163 = vadd.f32 %v1066, %v1147
  %v1164 = vadd.f32 %v1067, %v1148
  %v1165 = vadd.f32 %v1068, %v1149
  %v1166 = vld [vmem:[%s934] sm:$0xfe]
  %v1167 = vld [vmem:[%s934 + $0x10] sm:$0x1]
  %v1168 = vld [vmem:[%s934 + $0x20] sm:$0xfe]
  %v1169 = vld [vmem:[%s934 + $0x30] sm:$0x1]
  %v1170 = vld [vmem:[%s934 + $0x40] sm:$0xfe]
  %v1171 = vld [vmem:[%s934 + $0x50] sm:$0x1]
  %v1172 = vld [vmem:[%s934 + $0x60] sm:$0xfe]
  %v1173 = vld [vmem:[%s934 + $0x70] sm:$0x1]
  %v1174 = vld [vmem:[%s934 + $0xc0] sm:$0xfe]
  %v1175 = vld [vmem:[%s934 + $0xd0] sm:$0x1]
  %v1176 = vld [vmem:[%s934 + $0xe0] sm:$0xfe]
  %v1177 = vld [vmem:[%s934 + $0xf0] sm:$0x1]
  %v1178 = vld [vmem:[%s934 + $0x100] sm:$0xfe]
  %v1179 = vld [vmem:[%s934 + $0x110] sm:$0x1]
  %v1180 = vld [vmem:[%s934 + $0x120] sm:$0xfe]
  %v1181 = vld [vmem:[%s934 + $0x130] sm:$0x1]
  %v1198 = vrot.slane %v1166, 1
  %v1199 = vrot.slane %v1167, 1
  %v1200 = vsel %vm278, %v1198, %v1199
  %v1201 = vrot.slane %v1168, 1
  %v1202 = vrot.slane %v1169, 1
  %v1203 = vsel %vm278, %v1201, %v1202
  %v1204 = vrot.slane %v1170, 1
  %v1205 = vrot.slane %v1171, 1
  %v1206 = vsel %vm278, %v1204, %v1205
  %v1207 = vrot.slane %v1172, 1
  %v1208 = vrot.slane %v1173, 1
  %v1209 = vsel %vm278, %v1207, %v1208
  %v1210 = vrot.slane %v1174, 1
  %v1211 = vrot.slane %v1175, 1
  %v1212 = vsel %vm278, %v1210, %v1211
  %v1213 = vrot.slane %v1176, 1
  %v1214 = vrot.slane %v1177, 1
  %v1215 = vsel %vm278, %v1213, %v1214
  %v1216 = vrot.slane %v1178, 1
  %v1217 = vrot.slane %v1179, 1
  %v1218 = vsel %vm278, %v1216, %v1217
  %v1219 = vrot.slane %v1180, 1
  %v1220 = vrot.slane %v1181, 1
  %v1221 = vsel %vm278, %v1219, %v1220
  %v1230 = vld [vmem:[%s1 + $0xc] sm:$0x1]
  %v1231 = vlaneseq
  %v1232 = vshrl.u32 %v1231, 7
  %v1233 = vsub.s32 0, %v1232
  %v1234 = vrot.slane %v1230, %v1233
  %v1235 = vmul.f32 %v1200, %v1234
  %v1236 = vmul.f32 %v1203, %v1234
  %v1237 = vmul.f32 %v1206, %v1234
  %v1238 = vmul.f32 %v1209, %v1234
  %v1239 = vmul.f32 %v1212, %v1234
  %v1240 = vmul.f32 %v1215, %v1234
  %v1241 = vmul.f32 %v1218, %v1234
  %v1242 = vmul.f32 %v1221, %v1234
  %v1243 = vadd.f32 %v1158, %v1235
  %v1244 = vadd.f32 %v1159, %v1236
  %v1245 = vadd.f32 %v1160, %v1237
  %v1246 = vadd.f32 %v1161, %v1238
  %v1247 = vadd.f32 %v1162, %v1239
  %v1248 = vadd.f32 %v1163, %v1240
  %v1249 = vadd.f32 %v1164, %v1241
  %v1250 = vadd.f32 %v1165, %v1242
  %v1251 = vld [vmem:[%s934 + $0x8] sm:$0xfe]
  %v1252 = vld [vmem:[%s934 + $0x18] sm:$0x1]
  %v1253 = vld [vmem:[%s934 + $0x28] sm:$0xfe]
  %v1254 = vld [vmem:[%s934 + $0x38] sm:$0x1]
  %v1255 = vld [vmem:[%s934 + $0x48] sm:$0xfe]
  %v1256 = vld [vmem:[%s934 + $0x58] sm:$0x1]
  %v1257 = vld [vmem:[%s934 + $0x68] sm:$0xfe]
  %v1258 = vld [vmem:[%s934 + $0x78] sm:$0x1]
  %v1259 = vld [vmem:[%s934 + $0xc8] sm:$0xfe]
  %v1260 = vld [vmem:[%s934 + $0xd8] sm:$0x1]
  %v1261 = vld [vmem:[%s934 + $0xe8] sm:$0xfe]
  %v1262 = vld [vmem:[%s934 + $0xf8] sm:$0x1]
  %v1263 = vld [vmem:[%s934 + $0x108] sm:$0xfe]
  %v1264 = vld [vmem:[%s934 + $0x118] sm:$0x1]
  %v1265 = vld [vmem:[%s934 + $0x128] sm:$0xfe]
  %v1266 = vld [vmem:[%s934 + $0x138] sm:$0x1]
  %v1283 = vrot.slane %v1251, 1
  %v1284 = vrot.slane %v1252, 1
  %v1285 = vsel %vm278, %v1283, %v1284
  %v1286 = vrot.slane %v1253, 1
  %v1287 = vrot.slane %v1254, 1
  %v1288 = vsel %vm278, %v1286, %v1287
  %v1289 = vrot.slane %v1255, 1
  %v1290 = vrot.slane %v1256, 1
  %v1291 = vsel %vm278, %v1289, %v1290
  %v1292 = vrot.slane %v1257, 1
  %v1293 = vrot.slane %v1258, 1
  %v1294 = vsel %vm278, %v1292, %v1293
  %v1295 = vrot.slane %v1259, 1
  %v1296 = vrot.slane %v1260, 1
  %v1297 = vsel %vm278, %v1295, %v1296
  %v1298 = vrot.slane %v1261, 1
  %v1299 = vrot.slane %v1262, 1
  %v1300 = vsel %vm278, %v1298, %v1299
  %v1301 = vrot.slane %v1263, 1
  %v1302 = vrot.slane %v1264, 1
  %v1303 = vsel %vm278, %v1301, %v1302
  %v1304 = vrot.slane %v1265, 1
  %v1305 = vrot.slane %v1266, 1
  %v1306 = vsel %vm278, %v1304, %v1305
  %v1315 = vld [vmem:[%s1 + $0xd] sm:$0x1]
  %v1316 = vlaneseq
  %v1317 = vshrl.u32 %v1316, 7
  %v1318 = vsub.s32 0, %v1317
  %v1319 = vrot.slane %v1315, %v1318
  %1321 = vrot.lane.b32.xlu0 %v1319, 16
  %v1322 = vpop.permute.xlu0 %1321
  %v1324 = vmul.f32 %v1200, %v1322
  %v1325 = vmul.f32 %v1285, %v1322
  %v1326 = vmul.f32 %v1203, %v1322
  %v1327 = vmul.f32 %v1288, %v1322
  %v1328 = vmul.f32 %v1206, %v1322
  %v1329 = vmul.f32 %v1291, %v1322
  %v1330 = vmul.f32 %v1209, %v1322
  %v1331 = vmul.f32 %v1294, %v1322
  %v1332 = vmul.f32 %v1212, %v1322
  %v1333 = vmul.f32 %v1297, %v1322
  %v1334 = vmul.f32 %v1215, %v1322
  %v1335 = vmul.f32 %v1300, %v1322
  %v1336 = vmul.f32 %v1218, %v1322
  %v1337 = vmul.f32 %v1303, %v1322
  %v1338 = vmul.f32 %v1221, %v1322
  %v1339 = vmul.f32 %v1306, %v1322
  %1356 = vrot.lane.b32.xlu0 %v1324, 112
  %v1357 = vpop.permute.xlu0 %1356
  %1358 = vrot.lane.b32.xlu0 %v1325, 112
  %v1359 = vpop.permute.xlu0 %1358
  %1360 = vrot.lane.b32.xlu0 %v1326, 112
  %v1361 = vpop.permute.xlu0 %1360
  %1362 = vrot.lane.b32.xlu0 %v1327, 112
  %v1363 = vpop.permute.xlu0 %1362
  %1364 = vrot.lane.b32.xlu0 %v1328, 112
  %v1365 = vpop.permute.xlu0 %1364
  %1366 = vrot.lane.b32.xlu0 %v1329, 112
  %v1367 = vpop.permute.xlu0 %1366
  %1368 = vrot.lane.b32.xlu0 %v1330, 112
  %v1369 = vpop.permute.xlu0 %1368
  %1370 = vrot.lane.b32.xlu0 %v1331, 112
  %v1371 = vpop.permute.xlu0 %1370
  %1372 = vrot.lane.b32.xlu0 %v1332, 112
  %v1373 = vpop.permute.xlu0 %1372
  %1374 = vrot.lane.b32.xlu0 %v1333, 112
  %v1375 = vpop.permute.xlu0 %1374
  %1376 = vrot.lane.b32.xlu0 %v1334, 112
  %v1377 = vpop.permute.xlu0 %1376
  %1378 = vrot.lane.b32.xlu0 %v1335, 112
  %v1379 = vpop.permute.xlu0 %1378
  %1380 = vrot.lane.b32.xlu0 %v1336, 112
  %v1381 = vpop.permute.xlu0 %1380
  %1382 = vrot.lane.b32.xlu0 %v1337, 112
  %v1383 = vpop.permute.xlu0 %1382
  %1384 = vrot.lane.b32.xlu0 %v1338, 112
  %v1385 = vpop.permute.xlu0 %1384
  %1386 = vrot.lane.b32.xlu0 %v1339, 112
  %v1387 = vpop.permute.xlu0 %1386
  %v1388 = vsel %vm123, %v1357, %v1359
  %v1389 = vsel %vm123, %v1361, %v1363
  %v1390 = vsel %vm123, %v1365, %v1367
  %v1391 = vsel %vm123, %v1369, %v1371
  %v1392 = vsel %vm123, %v1373, %v1375
  %v1393 = vsel %vm123, %v1377, %v1379
  %v1394 = vsel %vm123, %v1381, %v1383
  %v1395 = vsel %vm123, %v1385, %v1387
  %v1404 = vadd.f32 %v1243, %v1388
  %v1405 = vadd.f32 %v1244, %v1389
  %v1406 = vadd.f32 %v1245, %v1390
  %v1407 = vadd.f32 %v1246, %v1391
  %v1408 = vadd.f32 %v1247, %v1392
  %v1409 = vadd.f32 %v1248, %v1393
  %v1410 = vadd.f32 %v1249, %v1394
  %v1411 = vadd.f32 %v1250, %v1395
  %v1412 = vld [vmem:[%s1 + $0xe] sm:$0x1]
  %v1413 = vlaneseq
  %v1414 = vshrl.u32 %v1413, 7
  %v1415 = vsub.s32 0, %v1414
  %v1416 = vrot.slane %v1412, %v1415
  %1418 = vrot.lane.b32.xlu0 %v1416, 32
  %v1419 = vpop.permute.xlu0 %1418
  %v1421 = vmul.f32 %v1200, %v1419
  %v1422 = vmul.f32 %v1285, %v1419
  %v1423 = vmul.f32 %v1203, %v1419
  %v1424 = vmul.f32 %v1288, %v1419
  %v1425 = vmul.f32 %v1206, %v1419
  %v1426 = vmul.f32 %v1291, %v1419
  %v1427 = vmul.f32 %v1209, %v1419
  %v1428 = vmul.f32 %v1294, %v1419
  %v1429 = vmul.f32 %v1212, %v1419
  %v1430 = vmul.f32 %v1297, %v1419
  %v1431 = vmul.f32 %v1215, %v1419
  %v1432 = vmul.f32 %v1300, %v1419
  %v1433 = vmul.f32 %v1218, %v1419
  %v1434 = vmul.f32 %v1303, %v1419
  %v1435 = vmul.f32 %v1221, %v1419
  %v1436 = vmul.f32 %v1306, %v1419
  %1453 = vrot.lane.b32.xlu0 %v1421, 96
  %v1454 = vpop.permute.xlu0 %1453
  %1455 = vrot.lane.b32.xlu0 %v1422, 96
  %v1456 = vpop.permute.xlu0 %1455
  %1457 = vrot.lane.b32.xlu0 %v1423, 96
  %v1458 = vpop.permute.xlu0 %1457
  %1459 = vrot.lane.b32.xlu0 %v1424, 96
  %v1460 = vpop.permute.xlu0 %1459
  %1461 = vrot.lane.b32.xlu0 %v1425, 96
  %v1462 = vpop.permute.xlu0 %1461
  %1463 = vrot.lane.b32.xlu0 %v1426, 96
  %v1464 = vpop.permute.xlu0 %1463
  %1465 = vrot.lane.b32.xlu0 %v1427, 96
  %v1466 = vpop.permute.xlu0 %1465
  %1467 = vrot.lane.b32.xlu0 %v1428, 96
  %v1468 = vpop.permute.xlu0 %1467
  %1469 = vrot.lane.b32.xlu0 %v1429, 96
  %v1470 = vpop.permute.xlu0 %1469
  %1471 = vrot.lane.b32.xlu0 %v1430, 96
  %v1472 = vpop.permute.xlu0 %1471
  %1473 = vrot.lane.b32.xlu0 %v1431, 96
  %v1474 = vpop.permute.xlu0 %1473
  %1475 = vrot.lane.b32.xlu0 %v1432, 96
  %v1476 = vpop.permute.xlu0 %1475
  %1477 = vrot.lane.b32.xlu0 %v1433, 96
  %v1478 = vpop.permute.xlu0 %1477
  %1479 = vrot.lane.b32.xlu0 %v1434, 96
  %v1480 = vpop.permute.xlu0 %1479
  %1481 = vrot.lane.b32.xlu0 %v1435, 96
  %v1482 = vpop.permute.xlu0 %1481
  %1483 = vrot.lane.b32.xlu0 %v1436, 96
  %v1484 = vpop.permute.xlu0 %1483
  %v1485 = vsel %vm221, %v1454, %v1456
  %v1486 = vsel %vm221, %v1458, %v1460
  %v1487 = vsel %vm221, %v1462, %v1464
  %v1488 = vsel %vm221, %v1466, %v1468
  %v1489 = vsel %vm221, %v1470, %v1472
  %v1490 = vsel %vm221, %v1474, %v1476
  %v1491 = vsel %vm221, %v1478, %v1480
  %v1492 = vsel %vm221, %v1482, %v1484
  %v1501 = vadd.f32 %v1404, %v1485
  %v1502 = vadd.f32 %v1405, %v1486
  %v1503 = vadd.f32 %v1406, %v1487
  %v1504 = vadd.f32 %v1407, %v1488
  %v1505 = vadd.f32 %v1408, %v1489
  %v1506 = vadd.f32 %v1409, %v1490
  %v1507 = vadd.f32 %v1410, %v1491
  %v1508 = vadd.f32 %v1411, %v1492
  %v1509 = vld [vmem:[%s934] sm:$0xfc]
  %v1510 = vld [vmem:[%s934 + $0x10] sm:$0x3]
  %v1511 = vld [vmem:[%s934 + $0x20] sm:$0xfc]
  %v1512 = vld [vmem:[%s934 + $0x30] sm:$0x3]
  %v1513 = vld [vmem:[%s934 + $0x40] sm:$0xfc]
  %v1514 = vld [vmem:[%s934 + $0x50] sm:$0x3]
  %v1515 = vld [vmem:[%s934 + $0x60] sm:$0xfc]
  %v1516 = vld [vmem:[%s934 + $0x70] sm:$0x3]
  %v1517 = vld [vmem:[%s934 + $0xc0] sm:$0xfc]
  %v1518 = vld [vmem:[%s934 + $0xd0] sm:$0x3]
  %v1519 = vld [vmem:[%s934 + $0xe0] sm:$0xfc]
  %v1520 = vld [vmem:[%s934 + $0xf0] sm:$0x3]
  %v1521 = vld [vmem:[%s934 + $0x100] sm:$0xfc]
  %v1522 = vld [vmem:[%s934 + $0x110] sm:$0x3]
  %v1523 = vld [vmem:[%s934 + $0x120] sm:$0xfc]
  %v1524 = vld [vmem:[%s934 + $0x130] sm:$0x3]
  %v1541 = vrot.slane %v1509, 2
  %v1542 = vrot.slane %v1510, 2
  %v1543 = vsel %vm622, %v1541, %v1542
  %v1544 = vrot.slane %v1511, 2
  %v1545 = vrot.slane %v1512, 2
  %v1546 = vsel %vm622, %v1544, %v1545
  %v1547 = vrot.slane %v1513, 2
  %v1548 = vrot.slane %v1514, 2
  %v1549 = vsel %vm622, %v1547, %v1548
  %v1550 = vrot.slane %v1515, 2
  %v1551 = vrot.slane %v1516, 2
  %v1552 = vsel %vm622, %v1550, %v1551
  %v1553 = vrot.slane %v1517, 2
  %v1554 = vrot.slane %v1518, 2
  %v1555 = vsel %vm622, %v1553, %v1554
  %v1556 = vrot.slane %v1519, 2
  %v1557 = vrot.slane %v1520, 2
  %v1558 = vsel %vm622, %v1556, %v1557
  %v1559 = vrot.slane %v1521, 2
  %v1560 = vrot.slane %v1522, 2
  %v1561 = vsel %vm622, %v1559, %v1560
  %v1562 = vrot.slane %v1523, 2
  %v1563 = vrot.slane %v1524, 2
  %v1564 = vsel %vm622, %v1562, %v1563
  %v1573 = vld [vmem:[%s1 + $0xf] sm:$0x1]
  %v1574 = vlaneseq
  %v1575 = vshrl.u32 %v1574, 7
  %v1576 = vsub.s32 0, %v1575
  %v1577 = vrot.slane %v1573, %v1576
  %v1578 = vmul.f32 %v1543, %v1577
  %v1579 = vmul.f32 %v1546, %v1577
  %v1580 = vmul.f32 %v1549, %v1577
  %v1581 = vmul.f32 %v1552, %v1577
  %v1582 = vmul.f32 %v1555, %v1577
  %v1583 = vmul.f32 %v1558, %v1577
  %v1584 = vmul.f32 %v1561, %v1577
  %v1585 = vmul.f32 %v1564, %v1577
  %v1586 = vadd.f32 %v1501, %v1578
  %v1587 = vadd.f32 %v1502, %v1579
  %v1588 = vadd.f32 %v1503, %v1580
  %v1589 = vadd.f32 %v1504, %v1581
  %v1590 = vadd.f32 %v1505, %v1582
  %v1591 = vadd.f32 %v1506, %v1583
  %v1592 = vadd.f32 %v1507, %v1584
  %v1593 = vadd.f32 %v1508, %v1585
  %v1594 = vld [vmem:[%s934 + $0x8] sm:$0xfc]
  %v1595 = vld [vmem:[%s934 + $0x18] sm:$0x3]
  %v1596 = vld [vmem:[%s934 + $0x28] sm:$0xfc]
  %v1597 = vld [vmem:[%s934 + $0x38] sm:$0x3]
  %v1598 = vld [vmem:[%s934 + $0x48] sm:$0xfc]
  %v1599 = vld [vmem:[%s934 + $0x58] sm:$0x3]
  %v1600 = vld [vmem:[%s934 + $0x68] sm:$0xfc]
  %v1601 = vld [vmem:[%s934 + $0x78] sm:$0x3]
  %v1602 = vld [vmem:[%s934 + $0xc8] sm:$0xfc]
  %v1603 = vld [vmem:[%s934 + $0xd8] sm:$0x3]
  %v1604 = vld [vmem:[%s934 + $0xe8] sm:$0xfc]
  %v1605 = vld [vmem:[%s934 + $0xf8] sm:$0x3]
  %v1606 = vld [vmem:[%s934 + $0x108] sm:$0xfc]
  %v1607 = vld [vmem:[%s934 + $0x118] sm:$0x3]
  %v1608 = vld [vmem:[%s934 + $0x128] sm:$0xfc]
  %v1609 = vld [vmem:[%s934 + $0x138] sm:$0x3]
  %v1626 = vrot.slane %v1594, 2
  %v1627 = vrot.slane %v1595, 2
  %v1628 = vsel %vm622, %v1626, %v1627
  %v1629 = vrot.slane %v1596, 2
  %v1630 = vrot.slane %v1597, 2
  %v1631 = vsel %vm622, %v1629, %v1630
  %v1632 = vrot.slane %v1598, 2
  %v1633 = vrot.slane %v1599, 2
  %v1634 = vsel %vm622, %v1632, %v1633
  %v1635 = vrot.slane %v1600, 2
  %v1636 = vrot.slane %v1601, 2
  %v1637 = vsel %vm622, %v1635, %v1636
  %v1638 = vrot.slane %v1602, 2
  %v1639 = vrot.slane %v1603, 2
  %v1640 = vsel %vm622, %v1638, %v1639
  %v1641 = vrot.slane %v1604, 2
  %v1642 = vrot.slane %v1605, 2
  %v1643 = vsel %vm622, %v1641, %v1642
  %v1644 = vrot.slane %v1606, 2
  %v1645 = vrot.slane %v1607, 2
  %v1646 = vsel %vm622, %v1644, %v1645
  %v1647 = vrot.slane %v1608, 2
  %v1648 = vrot.slane %v1609, 2
  %v1649 = vsel %vm622, %v1647, %v1648
  %v1658 = vld [vmem:[%s1 + $0x10] sm:$0x1]
  %v1659 = vlaneseq
  %v1660 = vshrl.u32 %v1659, 7
  %v1661 = vsub.s32 0, %v1660
  %v1662 = vrot.slane %v1658, %v1661
  %1664 = vrot.lane.b32.xlu0 %v1662, 16
  %v1665 = vpop.permute.xlu0 %1664
  %v1667 = vmul.f32 %v1543, %v1665
  %v1668 = vmul.f32 %v1628, %v1665
  %v1669 = vmul.f32 %v1546, %v1665
  %v1670 = vmul.f32 %v1631, %v1665
  %v1671 = vmul.f32 %v1549, %v1665
  %v1672 = vmul.f32 %v1634, %v1665
  %v1673 = vmul.f32 %v1552, %v1665
  %v1674 = vmul.f32 %v1637, %v1665
  %v1675 = vmul.f32 %v1555, %v1665
  %v1676 = vmul.f32 %v1640, %v1665
  %v1677 = vmul.f32 %v1558, %v1665
  %v1678 = vmul.f32 %v1643, %v1665
  %v1679 = vmul.f32 %v1561, %v1665
  %v1680 = vmul.f32 %v1646, %v1665
  %v1681 = vmul.f32 %v1564, %v1665
  %v1682 = vmul.f32 %v1649, %v1665
  %1699 = vrot.lane.b32.xlu0 %v1667, 112
  %v1700 = vpop.permute.xlu0 %1699
  %1701 = vrot.lane.b32.xlu0 %v1668, 112
  %v1702 = vpop.permute.xlu0 %1701
  %1703 = vrot.lane.b32.xlu0 %v1669, 112
  %v1704 = vpop.permute.xlu0 %1703
  %1705 = vrot.lane.b32.xlu0 %v1670, 112
  %v1706 = vpop.permute.xlu0 %1705
  %1707 = vrot.lane.b32.xlu0 %v1671, 112
  %v1708 = vpop.permute.xlu0 %1707
  %1709 = vrot.lane.b32.xlu0 %v1672, 112
  %v1710 = vpop.permute.xlu0 %1709
  %1711 = vrot.lane.b32.xlu0 %v1673, 112
  %v1712 = vpop.permute.xlu0 %1711
  %1713 = vrot.lane.b32.xlu0 %v1674, 112
  %v1714 = vpop.permute.xlu0 %1713
  %1715 = vrot.lane.b32.xlu0 %v1675, 112
  %v1716 = vpop.permute.xlu0 %1715
  %1717 = vrot.lane.b32.xlu0 %v1676, 112
  %v1718 = vpop.permute.xlu0 %1717
  %1719 = vrot.lane.b32.xlu0 %v1677, 112
  %v1720 = vpop.permute.xlu0 %1719
  %1721 = vrot.lane.b32.xlu0 %v1678, 112
  %v1722 = vpop.permute.xlu0 %1721
  %1723 = vrot.lane.b32.xlu0 %v1679, 112
  %v1724 = vpop.permute.xlu0 %1723
  %1725 = vrot.lane.b32.xlu0 %v1680, 112
  %v1726 = vpop.permute.xlu0 %1725
  %1727 = vrot.lane.b32.xlu0 %v1681, 112
  %v1728 = vpop.permute.xlu0 %1727
  %1729 = vrot.lane.b32.xlu0 %v1682, 112
  %v1730 = vpop.permute.xlu0 %1729
  %v1731 = vsel %vm123, %v1700, %v1702
  %v1732 = vsel %vm123, %v1704, %v1706
  %v1733 = vsel %vm123, %v1708, %v1710
  %v1734 = vsel %vm123, %v1712, %v1714
  %v1735 = vsel %vm123, %v1716, %v1718
  %v1736 = vsel %vm123, %v1720, %v1722
  %v1737 = vsel %vm123, %v1724, %v1726
  %v1738 = vsel %vm123, %v1728, %v1730
  %v1747 = vadd.f32 %v1586, %v1731
  %v1748 = vadd.f32 %v1587, %v1732
  %v1749 = vadd.f32 %v1588, %v1733
  %v1750 = vadd.f32 %v1589, %v1734
  %v1751 = vadd.f32 %v1590, %v1735
  %v1752 = vadd.f32 %v1591, %v1736
  %v1753 = vadd.f32 %v1592, %v1737
  %v1754 = vadd.f32 %v1593, %v1738
  %v1755 = vld [vmem:[%s1 + $0x11] sm:$0x1]
  %v1756 = vlaneseq
  %v1757 = vshrl.u32 %v1756, 7
  %v1758 = vsub.s32 0, %v1757
  %v1759 = vrot.slane %v1755, %v1758
  %1761 = vrot.lane.b32.xlu0 %v1759, 32
  %v1762 = vpop.permute.xlu0 %1761
  %v1764 = vmul.f32 %v1543, %v1762
  %v1765 = vmul.f32 %v1628, %v1762
  %v1766 = vmul.f32 %v1546, %v1762
  %v1767 = vmul.f32 %v1631, %v1762
  %v1768 = vmul.f32 %v1549, %v1762
  %v1769 = vmul.f32 %v1634, %v1762
  %v1770 = vmul.f32 %v1552, %v1762
  %v1771 = vmul.f32 %v1637, %v1762
  %v1772 = vmul.f32 %v1555, %v1762
  %v1773 = vmul.f32 %v1640, %v1762
  %v1774 = vmul.f32 %v1558, %v1762
  %v1775 = vmul.f32 %v1643, %v1762
  %v1776 = vmul.f32 %v1561, %v1762
  %v1777 = vmul.f32 %v1646, %v1762
  %v1778 = vmul.f32 %v1564, %v1762
  %v1779 = vmul.f32 %v1649, %v1762
  %1796 = vrot.lane.b32.xlu0 %v1764, 96
  %v1797 = vpop.permute.xlu0 %1796
  %1798 = vrot.lane.b32.xlu0 %v1765, 96
  %v1799 = vpop.permute.xlu0 %1798
  %1800 = vrot.lane.b32.xlu0 %v1766, 96
  %v1801 = vpop.permute.xlu0 %1800
  %1802 = vrot.lane.b32.xlu0 %v1767, 96
  %v1803 = vpop.permute.xlu0 %1802
  %1804 = vrot.lane.b32.xlu0 %v1768, 96
  %v1805 = vpop.permute.xlu0 %1804
  %1806 = vrot.lane.b32.xlu0 %v1769, 96
  %v1807 = vpop.permute.xlu0 %1806
  %1808 = vrot.lane.b32.xlu0 %v1770, 96
  %v1809 = vpop.permute.xlu0 %1808
  %1810 = vrot.lane.b32.xlu0 %v1771, 96
  %v1811 = vpop.permute.xlu0 %1810
  %1812 = vrot.lane.b32.xlu0 %v1772, 96
  %v1813 = vpop.permute.xlu0 %1812
  %1814 = vrot.lane.b32.xlu0 %v1773, 96
  %v1815 = vpop.permute.xlu0 %1814
  %1816 = vrot.lane.b32.xlu0 %v1774, 96
  %v1817 = vpop.permute.xlu0 %1816
  %1818 = vrot.lane.b32.xlu0 %v1775, 96
  %v1819 = vpop.permute.xlu0 %1818
  %1820 = vrot.lane.b32.xlu0 %v1776, 96
  %v1821 = vpop.permute.xlu0 %1820
  %1822 = vrot.lane.b32.xlu0 %v1777, 96
  %v1823 = vpop.permute.xlu0 %1822
  %1824 = vrot.lane.b32.xlu0 %v1778, 96
  %v1825 = vpop.permute.xlu0 %1824
  %1826 = vrot.lane.b32.xlu0 %v1779, 96
  %v1827 = vpop.permute.xlu0 %1826
  %v1828 = vsel %vm221, %v1797, %v1799
  %v1829 = vsel %vm221, %v1801, %v1803
  %v1830 = vsel %vm221, %v1805, %v1807
  %v1831 = vsel %vm221, %v1809, %v1811
  %v1832 = vsel %vm221, %v1813, %v1815
  %v1833 = vsel %vm221, %v1817, %v1819
  %v1834 = vsel %vm221, %v1821, %v1823
  %v1835 = vsel %vm221, %v1825, %v1827
  %v1844 = vadd.f32 %v1747, %v1828
  %v1845 = vadd.f32 %v1748, %v1829
  %v1846 = vadd.f32 %v1749, %v1830
  %v1847 = vadd.f32 %v1750, %v1831
  %v1848 = vadd.f32 %v1751, %v1832
  %v1849 = vadd.f32 %v1752, %v1833
  %v1850 = vadd.f32 %v1753, %v1834
  %v1851 = vadd.f32 %v1754, %v1835
  %s1852 = scalar_lea.vmem %s0, 64
  %v1853 = vld [vmem:[%s1852] sm:$0xff]
  %v1854 = vld [vmem:[%s1852 + $0x20] sm:$0xff]
  %v1855 = vld [vmem:[%s1852 + $0x40] sm:$0xff]
  %v1856 = vld [vmem:[%s1852 + $0x60] sm:$0xff]
  %v1857 = vld [vmem:[%s1852 + $0xc0] sm:$0xff]
  %v1858 = vld [vmem:[%s1852 + $0xe0] sm:$0xff]
  %v1859 = vld [vmem:[%s1852 + $0x100] sm:$0xff]
  %v1860 = vld [vmem:[%s1852 + $0x120] sm:$0xff]
  %v1861 = vld [vmem:[%s1 + $0x12] sm:$0x1]
  %v1862 = vlaneseq
  %v1863 = vshrl.u32 %v1862, 7
  %v1864 = vsub.s32 0, %v1863
  %v1865 = vrot.slane %v1861, %v1864
  %v1866 = vmul.f32 %v1853, %v1865
  %v1867 = vmul.f32 %v1854, %v1865
  %v1868 = vmul.f32 %v1855, %v1865
  %v1869 = vmul.f32 %v1856, %v1865
  %v1870 = vmul.f32 %v1857, %v1865
  %v1871 = vmul.f32 %v1858, %v1865
  %v1872 = vmul.f32 %v1859, %v1865
  %v1873 = vmul.f32 %v1860, %v1865
  %v1874 = vadd.f32 %v1844, %v1866
  %v1875 = vadd.f32 %v1845, %v1867
  %v1876 = vadd.f32 %v1846, %v1868
  %v1877 = vadd.f32 %v1847, %v1869
  %v1878 = vadd.f32 %v1848, %v1870
  %v1879 = vadd.f32 %v1849, %v1871
  %v1880 = vadd.f32 %v1850, %v1872
  %v1881 = vadd.f32 %v1851, %v1873
  %v1882 = vld [vmem:[%s1852 + $0x8] sm:$0xff]
  %v1883 = vld [vmem:[%s1852 + $0x28] sm:$0xff]
  %v1884 = vld [vmem:[%s1852 + $0x48] sm:$0xff]
  %v1885 = vld [vmem:[%s1852 + $0x68] sm:$0xff]
  %v1886 = vld [vmem:[%s1852 + $0xc8] sm:$0xff]
  %v1887 = vld [vmem:[%s1852 + $0xe8] sm:$0xff]
  %v1888 = vld [vmem:[%s1852 + $0x108] sm:$0xff]
  %v1889 = vld [vmem:[%s1852 + $0x128] sm:$0xff]
  %v1890 = vld [vmem:[%s1 + $0x13] sm:$0x1]
  %v1891 = vlaneseq
  %v1892 = vshrl.u32 %v1891, 7
  %v1893 = vsub.s32 0, %v1892
  %v1894 = vrot.slane %v1890, %v1893
  %1896 = vrot.lane.b32.xlu0 %v1894, 16
  %v1897 = vpop.permute.xlu0 %1896
  %v1899 = vmul.f32 %v1853, %v1897
  %v1900 = vmul.f32 %v1882, %v1897
  %v1901 = vmul.f32 %v1854, %v1897
  %v1902 = vmul.f32 %v1883, %v1897
  %v1903 = vmul.f32 %v1855, %v1897
  %v1904 = vmul.f32 %v1884, %v1897
  %v1905 = vmul.f32 %v1856, %v1897
  %v1906 = vmul.f32 %v1885, %v1897
  %v1907 = vmul.f32 %v1857, %v1897
  %v1908 = vmul.f32 %v1886, %v1897
  %v1909 = vmul.f32 %v1858, %v1897
  %v1910 = vmul.f32 %v1887, %v1897
  %v1911 = vmul.f32 %v1859, %v1897
  %v1912 = vmul.f32 %v1888, %v1897
  %v1913 = vmul.f32 %v1860, %v1897
  %v1914 = vmul.f32 %v1889, %v1897
  %1931 = vrot.lane.b32.xlu0 %v1899, 112
  %v1932 = vpop.permute.xlu0 %1931
  %1933 = vrot.lane.b32.xlu0 %v1900, 112
  %v1934 = vpop.permute.xlu0 %1933
  %1935 = vrot.lane.b32.xlu0 %v1901, 112
  %v1936 = vpop.permute.xlu0 %1935
  %1937 = vrot.lane.b32.xlu0 %v1902, 112
  %v1938 = vpop.permute.xlu0 %1937
  %1939 = vrot.lane.b32.xlu0 %v1903, 112
  %v1940 = vpop.permute.xlu0 %1939
  %1941 = vrot.lane.b32.xlu0 %v1904, 112
  %v1942 = vpop.permute.xlu0 %1941
  %1943 = vrot.lane.b32.xlu0 %v1905, 112
  %v1944 = vpop.permute.xlu0 %1943
  %1945 = vrot.lane.b32.xlu0 %v1906, 112
  %v1946 = vpop.permute.xlu0 %1945
  %1947 = vrot.lane.b32.xlu0 %v1907, 112
  %v1948 = vpop.permute.xlu0 %1947
  %1949 = vrot.lane.b32.xlu0 %v1908, 112
  %v1950 = vpop.permute.xlu0 %1949
  %1951 = vrot.lane.b32.xlu0 %v1909, 112
  %v1952 = vpop.permute.xlu0 %1951
  %1953 = vrot.lane.b32.xlu0 %v1910, 112
  %v1954 = vpop.permute.xlu0 %1953
  %1955 = vrot.lane.b32.xlu0 %v1911, 112
  %v1956 = vpop.permute.xlu0 %1955
  %1957 = vrot.lane.b32.xlu0 %v1912, 112
  %v1958 = vpop.permute.xlu0 %1957
  %1959 = vrot.lane.b32.xlu0 %v1913, 112
  %v1960 = vpop.permute.xlu0 %1959
  %1961 = vrot.lane.b32.xlu0 %v1914, 112
  %v1962 = vpop.permute.xlu0 %1961
  %v1963 = vsel %vm123, %v1932, %v1934
  %v1964 = vsel %vm123, %v1936, %v1938
  %v1965 = vsel %vm123, %v1940, %v1942
  %v1966 = vsel %vm123, %v1944, %v1946
  %v1967 = vsel %vm123, %v1948, %v1950
  %v1968 = vsel %vm123, %v1952, %v1954
  %v1969 = vsel %vm123, %v1956, %v1958
  %v1970 = vsel %vm123, %v1960, %v1962
  %v1979 = vadd.f32 %v1874, %v1963
  %v1980 = vadd.f32 %v1875, %v1964
  %v1981 = vadd.f32 %v1876, %v1965
  %v1982 = vadd.f32 %v1877, %v1966
  %v1983 = vadd.f32 %v1878, %v1967
  %v1984 = vadd.f32 %v1879, %v1968
  %v1985 = vadd.f32 %v1880, %v1969
  %v1986 = vadd.f32 %v1881, %v1970
  %v1987 = vld [vmem:[%s1 + $0x14] sm:$0x1]
  %v1988 = vlaneseq
  %v1989 = vshrl.u32 %v1988, 7
  %v1990 = vsub.s32 0, %v1989
  %v1991 = vrot.slane %v1987, %v1990
  %1993 = vrot.lane.b32.xlu0 %v1991, 32
  %v1994 = vpop.permute.xlu0 %1993
  %v1996 = vmul.f32 %v1853, %v1994
  %v1997 = vmul.f32 %v1882, %v1994
  %v1998 = vmul.f32 %v1854, %v1994
  %v1999 = vmul.f32 %v1883, %v1994
  %v2000 = vmul.f32 %v1855, %v1994
  %v2001 = vmul.f32 %v1884, %v1994
  %v2002 = vmul.f32 %v1856, %v1994
  %v2003 = vmul.f32 %v1885, %v1994
  %v2004 = vmul.f32 %v1857, %v1994
  %v2005 = vmul.f32 %v1886, %v1994
  %v2006 = vmul.f32 %v1858, %v1994
  %v2007 = vmul.f32 %v1887, %v1994
  %v2008 = vmul.f32 %v1859, %v1994
  %v2009 = vmul.f32 %v1888, %v1994
  %v2010 = vmul.f32 %v1860, %v1994
  %v2011 = vmul.f32 %v1889, %v1994
  %2028 = vrot.lane.b32.xlu0 %v1996, 96
  %v2029 = vpop.permute.xlu0 %2028
  %2030 = vrot.lane.b32.xlu0 %v1997, 96
  %v2031 = vpop.permute.xlu0 %2030
  %2032 = vrot.lane.b32.xlu0 %v1998, 96
  %v2033 = vpop.permute.xlu0 %2032
  %2034 = vrot.lane.b32.xlu0 %v1999, 96
  %v2035 = vpop.permute.xlu0 %2034
  %2036 = vrot.lane.b32.xlu0 %v2000, 96
  %v2037 = vpop.permute.xlu0 %2036
  %2038 = vrot.lane.b32.xlu0 %v2001, 96
  %v2039 = vpop.permute.xlu0 %2038
  %2040 = vrot.lane.b32.xlu0 %v2002, 96
  %v2041 = vpop.permute.xlu0 %2040
  %2042 = vrot.lane.b32.xlu0 %v2003, 96
  %v2043 = vpop.permute.xlu0 %2042
  %2044 = vrot.lane.b32.xlu0 %v2004, 96
  %v2045 = vpop.permute.xlu0 %2044
  %2046 = vrot.lane.b32.xlu0 %v2005, 96
  %v2047 = vpop.permute.xlu0 %2046
  %2048 = vrot.lane.b32.xlu0 %v2006, 96
  %v2049 = vpop.permute.xlu0 %2048
  %2050 = vrot.lane.b32.xlu0 %v2007, 96
  %v2051 = vpop.permute.xlu0 %2050
  %2052 = vrot.lane.b32.xlu0 %v2008, 96
  %v2053 = vpop.permute.xlu0 %2052
  %2054 = vrot.lane.b32.xlu0 %v2009, 96
  %v2055 = vpop.permute.xlu0 %2054
  %2056 = vrot.lane.b32.xlu0 %v2010, 96
  %v2057 = vpop.permute.xlu0 %2056
  %2058 = vrot.lane.b32.xlu0 %v2011, 96
  %v2059 = vpop.permute.xlu0 %2058
  %v2060 = vsel %vm221, %v2029, %v2031
  %v2061 = vsel %vm221, %v2033, %v2035
  %v2062 = vsel %vm221, %v2037, %v2039
  %v2063 = vsel %vm221, %v2041, %v2043
  %v2064 = vsel %vm221, %v2045, %v2047
  %v2065 = vsel %vm221, %v2049, %v2051
  %v2066 = vsel %vm221, %v2053, %v2055
  %v2067 = vsel %vm221, %v2057, %v2059
  %v2076 = vadd.f32 %v1979, %v2060
  %v2077 = vadd.f32 %v1980, %v2061
  %v2078 = vadd.f32 %v1981, %v2062
  %v2079 = vadd.f32 %v1982, %v2063
  %v2080 = vadd.f32 %v1983, %v2064
  %v2081 = vadd.f32 %v1984, %v2065
  %v2082 = vadd.f32 %v1985, %v2066
  %v2083 = vadd.f32 %v1986, %v2067
  %v2084 = vld [vmem:[%s1852] sm:$0xfe]
  %v2085 = vld [vmem:[%s1852 + $0x10] sm:$0x1]
  %v2086 = vld [vmem:[%s1852 + $0x20] sm:$0xfe]
  %v2087 = vld [vmem:[%s1852 + $0x30] sm:$0x1]
  %v2088 = vld [vmem:[%s1852 + $0x40] sm:$0xfe]
  %v2089 = vld [vmem:[%s1852 + $0x50] sm:$0x1]
  %v2090 = vld [vmem:[%s1852 + $0x60] sm:$0xfe]
  %v2091 = vld [vmem:[%s1852 + $0x70] sm:$0x1]
  %v2092 = vld [vmem:[%s1852 + $0xc0] sm:$0xfe]
  %v2093 = vld [vmem:[%s1852 + $0xd0] sm:$0x1]
  %v2094 = vld [vmem:[%s1852 + $0xe0] sm:$0xfe]
  %v2095 = vld [vmem:[%s1852 + $0xf0] sm:$0x1]
  %v2096 = vld [vmem:[%s1852 + $0x100] sm:$0xfe]
  %v2097 = vld [vmem:[%s1852 + $0x110] sm:$0x1]
  %v2098 = vld [vmem:[%s1852 + $0x120] sm:$0xfe]
  %v2099 = vld [vmem:[%s1852 + $0x130] sm:$0x1]
  %v2116 = vrot.slane %v2084, 1
  %v2117 = vrot.slane %v2085, 1
  %v2118 = vsel %vm278, %v2116, %v2117
  %v2119 = vrot.slane %v2086, 1
  %v2120 = vrot.slane %v2087, 1
  %v2121 = vsel %vm278, %v2119, %v2120
  %v2122 = vrot.slane %v2088, 1
  %v2123 = vrot.slane %v2089, 1
  %v2124 = vsel %vm278, %v2122, %v2123
  %v2125 = vrot.slane %v2090, 1
  %v2126 = vrot.slane %v2091, 1
  %v2127 = vsel %vm278, %v2125, %v2126
  %v2128 = vrot.slane %v2092, 1
  %v2129 = vrot.slane %v2093, 1
  %v2130 = vsel %vm278, %v2128, %v2129
  %v2131 = vrot.slane %v2094, 1
  %v2132 = vrot.slane %v2095, 1
  %v2133 = vsel %vm278, %v2131, %v2132
  %v2134 = vrot.slane %v2096, 1
  %v2135 = vrot.slane %v2097, 1
  %v2136 = vsel %vm278, %v2134, %v2135
  %v2137 = vrot.slane %v2098, 1
  %v2138 = vrot.slane %v2099, 1
  %v2139 = vsel %vm278, %v2137, %v2138
  %v2148 = vld [vmem:[%s1 + $0x15] sm:$0x1]
  %v2149 = vlaneseq
  %v2150 = vshrl.u32 %v2149, 7
  %v2151 = vsub.s32 0, %v2150
  %v2152 = vrot.slane %v2148, %v2151
  %v2153 = vmul.f32 %v2118, %v2152
  %v2154 = vmul.f32 %v2121, %v2152
  %v2155 = vmul.f32 %v2124, %v2152
  %v2156 = vmul.f32 %v2127, %v2152
  %v2157 = vmul.f32 %v2130, %v2152
  %v2158 = vmul.f32 %v2133, %v2152
  %v2159 = vmul.f32 %v2136, %v2152
  %v2160 = vmul.f32 %v2139, %v2152
  %v2161 = vadd.f32 %v2076, %v2153
  %v2162 = vadd.f32 %v2077, %v2154
  %v2163 = vadd.f32 %v2078, %v2155
  %v2164 = vadd.f32 %v2079, %v2156
  %v2165 = vadd.f32 %v2080, %v2157
  %v2166 = vadd.f32 %v2081, %v2158
  %v2167 = vadd.f32 %v2082, %v2159
  %v2168 = vadd.f32 %v2083, %v2160
  %v2169 = vld [vmem:[%s1852 + $0x8] sm:$0xfe]
  %v2170 = vld [vmem:[%s1852 + $0x18] sm:$0x1]
  %v2171 = vld [vmem:[%s1852 + $0x28] sm:$0xfe]
  %v2172 = vld [vmem:[%s1852 + $0x38] sm:$0x1]
  %v2173 = vld [vmem:[%s1852 + $0x48] sm:$0xfe]
  %v2174 = vld [vmem:[%s1852 + $0x58] sm:$0x1]
  %v2175 = vld [vmem:[%s1852 + $0x68] sm:$0xfe]
  %v2176 = vld [vmem:[%s1852 + $0x78] sm:$0x1]
  %v2177 = vld [vmem:[%s1852 + $0xc8] sm:$0xfe]
  %v2178 = vld [vmem:[%s1852 + $0xd8] sm:$0x1]
  %v2179 = vld [vmem:[%s1852 + $0xe8] sm:$0xfe]
  %v2180 = vld [vmem:[%s1852 + $0xf8] sm:$0x1]
  %v2181 = vld [vmem:[%s1852 + $0x108] sm:$0xfe]
  %v2182 = vld [vmem:[%s1852 + $0x118] sm:$0x1]
  %v2183 = vld [vmem:[%s1852 + $0x128] sm:$0xfe]
  %v2184 = vld [vmem:[%s1852 + $0x138] sm:$0x1]
  %v2201 = vrot.slane %v2169, 1
  %v2202 = vrot.slane %v2170, 1
  %v2203 = vsel %vm278, %v2201, %v2202
  %v2204 = vrot.slane %v2171, 1
  %v2205 = vrot.slane %v2172, 1
  %v2206 = vsel %vm278, %v2204, %v2205
  %v2207 = vrot.slane %v2173, 1
  %v2208 = vrot.slane %v2174, 1
  %v2209 = vsel %vm278, %v2207, %v2208
  %v2210 = vrot.slane %v2175, 1
  %v2211 = vrot.slane %v2176, 1
  %v2212 = vsel %vm278, %v2210, %v2211
  %v2213 = vrot.slane %v2177, 1
  %v2214 = vrot.slane %v2178, 1
  %v2215 = vsel %vm278, %v2213, %v2214
  %v2216 = vrot.slane %v2179, 1
  %v2217 = vrot.slane %v2180, 1
  %v2218 = vsel %vm278, %v2216, %v2217
  %v2219 = vrot.slane %v2181, 1
  %v2220 = vrot.slane %v2182, 1
  %v2221 = vsel %vm278, %v2219, %v2220
  %v2222 = vrot.slane %v2183, 1
  %v2223 = vrot.slane %v2184, 1
  %v2224 = vsel %vm278, %v2222, %v2223
  %v2233 = vld [vmem:[%s1 + $0x16] sm:$0x1]
  %v2234 = vlaneseq
  %v2235 = vshrl.u32 %v2234, 7
  %v2236 = vsub.s32 0, %v2235
  %v2237 = vrot.slane %v2233, %v2236
  %2239 = vrot.lane.b32.xlu0 %v2237, 16
  %v2240 = vpop.permute.xlu0 %2239
  %v2242 = vmul.f32 %v2118, %v2240
  %v2243 = vmul.f32 %v2203, %v2240
  %v2244 = vmul.f32 %v2121, %v2240
  %v2245 = vmul.f32 %v2206, %v2240
  %v2246 = vmul.f32 %v2124, %v2240
  %v2247 = vmul.f32 %v2209, %v2240
  %v2248 = vmul.f32 %v2127, %v2240
  %v2249 = vmul.f32 %v2212, %v2240
  %v2250 = vmul.f32 %v2130, %v2240
  %v2251 = vmul.f32 %v2215, %v2240
  %v2252 = vmul.f32 %v2133, %v2240
  %v2253 = vmul.f32 %v2218, %v2240
  %v2254 = vmul.f32 %v2136, %v2240
  %v2255 = vmul.f32 %v2221, %v2240
  %v2256 = vmul.f32 %v2139, %v2240
  %v2257 = vmul.f32 %v2224, %v2240
  %2274 = vrot.lane.b32.xlu0 %v2242, 112
  %v2275 = vpop.permute.xlu0 %2274
  %2276 = vrot.lane.b32.xlu0 %v2243, 112
  %v2277 = vpop.permute.xlu0 %2276
  %2278 = vrot.lane.b32.xlu0 %v2244, 112
  %v2279 = vpop.permute.xlu0 %2278
  %2280 = vrot.lane.b32.xlu0 %v2245, 112
  %v2281 = vpop.permute.xlu0 %2280
  %2282 = vrot.lane.b32.xlu0 %v2246, 112
  %v2283 = vpop.permute.xlu0 %2282
  %2284 = vrot.lane.b32.xlu0 %v2247, 112
  %v2285 = vpop.permute.xlu0 %2284
  %2286 = vrot.lane.b32.xlu0 %v2248, 112
  %v2287 = vpop.permute.xlu0 %2286
  %2288 = vrot.lane.b32.xlu0 %v2249, 112
  %v2289 = vpop.permute.xlu0 %2288
  %2290 = vrot.lane.b32.xlu0 %v2250, 112
  %v2291 = vpop.permute.xlu0 %2290
  %2292 = vrot.lane.b32.xlu0 %v2251, 112
  %v2293 = vpop.permute.xlu0 %2292
  %2294 = vrot.lane.b32.xlu0 %v2252, 112
  %v2295 = vpop.permute.xlu0 %2294
  %2296 = vrot.lane.b32.xlu0 %v2253, 112
  %v2297 = vpop.permute.xlu0 %2296
  %2298 = vrot.lane.b32.xlu0 %v2254, 112
  %v2299 = vpop.permute.xlu0 %2298
  %2300 = vrot.lane.b32.xlu0 %v2255, 112
  %v2301 = vpop.permute.xlu0 %2300
  %2302 = vrot.lane.b32.xlu0 %v2256, 112
  %v2303 = vpop.permute.xlu0 %2302
  %2304 = vrot.lane.b32.xlu0 %v2257, 112
  %v2305 = vpop.permute.xlu0 %2304
  %v2306 = vsel %vm123, %v2275, %v2277
  %v2307 = vsel %vm123, %v2279, %v2281
  %v2308 = vsel %vm123, %v2283, %v2285
  %v2309 = vsel %vm123, %v2287, %v2289
  %v2310 = vsel %vm123, %v2291, %v2293
  %v2311 = vsel %vm123, %v2295, %v2297
  %v2312 = vsel %vm123, %v2299, %v2301
  %v2313 = vsel %vm123, %v2303, %v2305
  %v2322 = vadd.f32 %v2161, %v2306
  %v2323 = vadd.f32 %v2162, %v2307
  %v2324 = vadd.f32 %v2163, %v2308
  %v2325 = vadd.f32 %v2164, %v2309
  %v2326 = vadd.f32 %v2165, %v2310
  %v2327 = vadd.f32 %v2166, %v2311
  %v2328 = vadd.f32 %v2167, %v2312
  %v2329 = vadd.f32 %v2168, %v2313
  %v2330 = vld [vmem:[%s1 + $0x17] sm:$0x1]
  %v2331 = vlaneseq
  %v2332 = vshrl.u32 %v2331, 7
  %v2333 = vsub.s32 0, %v2332
  %v2334 = vrot.slane %v2330, %v2333
  %2336 = vrot.lane.b32.xlu0 %v2334, 32
  %v2337 = vpop.permute.xlu0 %2336
  %v2339 = vmul.f32 %v2118, %v2337
  %v2340 = vmul.f32 %v2203, %v2337
  %v2341 = vmul.f32 %v2121, %v2337
  %v2342 = vmul.f32 %v2206, %v2337
  %v2343 = vmul.f32 %v2124, %v2337
  %v2344 = vmul.f32 %v2209, %v2337
  %v2345 = vmul.f32 %v2127, %v2337
  %v2346 = vmul.f32 %v2212, %v2337
  %v2347 = vmul.f32 %v2130, %v2337
  %v2348 = vmul.f32 %v2215, %v2337
  %v2349 = vmul.f32 %v2133, %v2337
  %v2350 = vmul.f32 %v2218, %v2337
  %v2351 = vmul.f32 %v2136, %v2337
  %v2352 = vmul.f32 %v2221, %v2337
  %v2353 = vmul.f32 %v2139, %v2337
  %v2354 = vmul.f32 %v2224, %v2337
  %2371 = vrot.lane.b32.xlu0 %v2339, 96
  %v2372 = vpop.permute.xlu0 %2371
  %2373 = vrot.lane.b32.xlu0 %v2340, 96
  %v2374 = vpop.permute.xlu0 %2373
  %2375 = vrot.lane.b32.xlu0 %v2341, 96
  %v2376 = vpop.permute.xlu0 %2375
  %2377 = vrot.lane.b32.xlu0 %v2342, 96
  %v2378 = vpop.permute.xlu0 %2377
  %2379 = vrot.lane.b32.xlu0 %v2343, 96
  %v2380 = vpop.permute.xlu0 %2379
  %2381 = vrot.lane.b32.xlu0 %v2344, 96
  %v2382 = vpop.permute.xlu0 %2381
  %2383 = vrot.lane.b32.xlu0 %v2345, 96
  %v2384 = vpop.permute.xlu0 %2383
  %2385 = vrot.lane.b32.xlu0 %v2346, 96
  %v2386 = vpop.permute.xlu0 %2385
  %2387 = vrot.lane.b32.xlu0 %v2347, 96
  %v2388 = vpop.permute.xlu0 %2387
  %2389 = vrot.lane.b32.xlu0 %v2348, 96
  %v2390 = vpop.permute.xlu0 %2389
  %2391 = vrot.lane.b32.xlu0 %v2349, 96
  %v2392 = vpop.permute.xlu0 %2391
  %2393 = vrot.lane.b32.xlu0 %v2350, 96
  %v2394 = vpop.permute.xlu0 %2393
  %2395 = vrot.lane.b32.xlu0 %v2351, 96
  %v2396 = vpop.permute.xlu0 %2395
  %2397 = vrot.lane.b32.xlu0 %v2352, 96
  %v2398 = vpop.permute.xlu0 %2397
  %2399 = vrot.lane.b32.xlu0 %v2353, 96
  %v2400 = vpop.permute.xlu0 %2399
  %2401 = vrot.lane.b32.xlu0 %v2354, 96
  %v2402 = vpop.permute.xlu0 %2401
  %v2403 = vsel %vm221, %v2372, %v2374
  %v2404 = vsel %vm221, %v2376, %v2378
  %v2405 = vsel %vm221, %v2380, %v2382
  %v2406 = vsel %vm221, %v2384, %v2386
  %v2407 = vsel %vm221, %v2388, %v2390
  %v2408 = vsel %vm221, %v2392, %v2394
  %v2409 = vsel %vm221, %v2396, %v2398
  %v2410 = vsel %vm221, %v2400, %v2402
  %v2419 = vadd.f32 %v2322, %v2403
  %v2420 = vadd.f32 %v2323, %v2404
  %v2421 = vadd.f32 %v2324, %v2405
  %v2422 = vadd.f32 %v2325, %v2406
  %v2423 = vadd.f32 %v2326, %v2407
  %v2424 = vadd.f32 %v2327, %v2408
  %v2425 = vadd.f32 %v2328, %v2409
  %v2426 = vadd.f32 %v2329, %v2410
  %v2427 = vld [vmem:[%s1852] sm:$0xfc]
  %v2428 = vld [vmem:[%s1852 + $0x10] sm:$0x3]
  %v2429 = vld [vmem:[%s1852 + $0x20] sm:$0xfc]
  %v2430 = vld [vmem:[%s1852 + $0x30] sm:$0x3]
  %v2431 = vld [vmem:[%s1852 + $0x40] sm:$0xfc]
  %v2432 = vld [vmem:[%s1852 + $0x50] sm:$0x3]
  %v2433 = vld [vmem:[%s1852 + $0x60] sm:$0xfc]
  %v2434 = vld [vmem:[%s1852 + $0x70] sm:$0x3]
  %v2435 = vld [vmem:[%s1852 + $0xc0] sm:$0xfc]
  %v2436 = vld [vmem:[%s1852 + $0xd0] sm:$0x3]
  %v2437 = vld [vmem:[%s1852 + $0xe0] sm:$0xfc]
  %v2438 = vld [vmem:[%s1852 + $0xf0] sm:$0x3]
  %v2439 = vld [vmem:[%s1852 + $0x100] sm:$0xfc]
  %v2440 = vld [vmem:[%s1852 + $0x110] sm:$0x3]
  %v2441 = vld [vmem:[%s1852 + $0x120] sm:$0xfc]
  %v2442 = vld [vmem:[%s1852 + $0x130] sm:$0x3]
  %v2459 = vrot.slane %v2427, 2
  %v2460 = vrot.slane %v2428, 2
  %v2461 = vsel %vm622, %v2459, %v2460
  %v2462 = vrot.slane %v2429, 2
  %v2463 = vrot.slane %v2430, 2
  %v2464 = vsel %vm622, %v2462, %v2463
  %v2465 = vrot.slane %v2431, 2
  %v2466 = vrot.slane %v2432, 2
  %v2467 = vsel %vm622, %v2465, %v2466
  %v2468 = vrot.slane %v2433, 2
  %v2469 = vrot.slane %v2434, 2
  %v2470 = vsel %vm622, %v2468, %v2469
  %v2471 = vrot.slane %v2435, 2
  %v2472 = vrot.slane %v2436, 2
  %v2473 = vsel %vm622, %v2471, %v2472
  %v2474 = vrot.slane %v2437, 2
  %v2475 = vrot.slane %v2438, 2
  %v2476 = vsel %vm622, %v2474, %v2475
  %v2477 = vrot.slane %v2439, 2
  %v2478 = vrot.slane %v2440, 2
  %v2479 = vsel %vm622, %v2477, %v2478
  %v2480 = vrot.slane %v2441, 2
  %v2481 = vrot.slane %v2442, 2
  %v2482 = vsel %vm622, %v2480, %v2481
  %v2491 = vld [vmem:[%s1 + $0x18] sm:$0x1]
  %v2492 = vlaneseq
  %v2493 = vshrl.u32 %v2492, 7
  %v2494 = vsub.s32 0, %v2493
  %v2495 = vrot.slane %v2491, %v2494
  %v2496 = vmul.f32 %v2461, %v2495
  %v2497 = vmul.f32 %v2464, %v2495
  %v2498 = vmul.f32 %v2467, %v2495
  %v2499 = vmul.f32 %v2470, %v2495
  %v2500 = vmul.f32 %v2473, %v2495
  %v2501 = vmul.f32 %v2476, %v2495
  %v2502 = vmul.f32 %v2479, %v2495
  %v2503 = vmul.f32 %v2482, %v2495
  %v2504 = vadd.f32 %v2419, %v2496
  %v2505 = vadd.f32 %v2420, %v2497
  %v2506 = vadd.f32 %v2421, %v2498
  %v2507 = vadd.f32 %v2422, %v2499
  %v2508 = vadd.f32 %v2423, %v2500
  %v2509 = vadd.f32 %v2424, %v2501
  %v2510 = vadd.f32 %v2425, %v2502
  %v2511 = vadd.f32 %v2426, %v2503
  %v2512 = vld [vmem:[%s1852 + $0x8] sm:$0xfc]
  %v2513 = vld [vmem:[%s1852 + $0x18] sm:$0x3]
  %v2514 = vld [vmem:[%s1852 + $0x28] sm:$0xfc]
  %v2515 = vld [vmem:[%s1852 + $0x38] sm:$0x3]
  %v2516 = vld [vmem:[%s1852 + $0x48] sm:$0xfc]
  %v2517 = vld [vmem:[%s1852 + $0x58] sm:$0x3]
  %v2518 = vld [vmem:[%s1852 + $0x68] sm:$0xfc]
  %v2519 = vld [vmem:[%s1852 + $0x78] sm:$0x3]
  %v2520 = vld [vmem:[%s1852 + $0xc8] sm:$0xfc]
  %v2521 = vld [vmem:[%s1852 + $0xd8] sm:$0x3]
  %v2522 = vld [vmem:[%s1852 + $0xe8] sm:$0xfc]
  %v2523 = vld [vmem:[%s1852 + $0xf8] sm:$0x3]
  %v2524 = vld [vmem:[%s1852 + $0x108] sm:$0xfc]
  %v2525 = vld [vmem:[%s1852 + $0x118] sm:$0x3]
  %v2526 = vld [vmem:[%s1852 + $0x128] sm:$0xfc]
  %v2527 = vld [vmem:[%s1852 + $0x138] sm:$0x3]
  %v2544 = vrot.slane %v2512, 2
  %v2545 = vrot.slane %v2513, 2
  %v2546 = vsel %vm622, %v2544, %v2545
  %v2547 = vrot.slane %v2514, 2
  %v2548 = vrot.slane %v2515, 2
  %v2549 = vsel %vm622, %v2547, %v2548
  %v2550 = vrot.slane %v2516, 2
  %v2551 = vrot.slane %v2517, 2
  %v2552 = vsel %vm622, %v2550, %v2551
  %v2553 = vrot.slane %v2518, 2
  %v2554 = vrot.slane %v2519, 2
  %v2555 = vsel %vm622, %v2553, %v2554
  %v2556 = vrot.slane %v2520, 2
  %v2557 = vrot.slane %v2521, 2
  %v2558 = vsel %vm622, %v2556, %v2557
  %v2559 = vrot.slane %v2522, 2
  %v2560 = vrot.slane %v2523, 2
  %v2561 = vsel %vm622, %v2559, %v2560
  %v2562 = vrot.slane %v2524, 2
  %v2563 = vrot.slane %v2525, 2
  %v2564 = vsel %vm622, %v2562, %v2563
  %v2565 = vrot.slane %v2526, 2
  %v2566 = vrot.slane %v2527, 2
  %v2567 = vsel %vm622, %v2565, %v2566
  %v2576 = vld [vmem:[%s1 + $0x19] sm:$0x1]
  %v2577 = vlaneseq
  %v2578 = vshrl.u32 %v2577, 7
  %v2579 = vsub.s32 0, %v2578
  %v2580 = vrot.slane %v2576, %v2579
  %2582 = vrot.lane.b32.xlu0 %v2580, 16
  %v2583 = vpop.permute.xlu0 %2582
  %v2585 = vmul.f32 %v2461, %v2583
  %v2586 = vmul.f32 %v2546, %v2583
  %v2587 = vmul.f32 %v2464, %v2583
  %v2588 = vmul.f32 %v2549, %v2583
  %v2589 = vmul.f32 %v2467, %v2583
  %v2590 = vmul.f32 %v2552, %v2583
  %v2591 = vmul.f32 %v2470, %v2583
  %v2592 = vmul.f32 %v2555, %v2583
  %v2593 = vmul.f32 %v2473, %v2583
  %v2594 = vmul.f32 %v2558, %v2583
  %v2595 = vmul.f32 %v2476, %v2583
  %v2596 = vmul.f32 %v2561, %v2583
  %v2597 = vmul.f32 %v2479, %v2583
  %v2598 = vmul.f32 %v2564, %v2583
  %v2599 = vmul.f32 %v2482, %v2583
  %v2600 = vmul.f32 %v2567, %v2583
  %2617 = vrot.lane.b32.xlu0 %v2585, 112
  %v2618 = vpop.permute.xlu0 %2617
  %2619 = vrot.lane.b32.xlu0 %v2586, 112
  %v2620 = vpop.permute.xlu0 %2619
  %2621 = vrot.lane.b32.xlu0 %v2587, 112
  %v2622 = vpop.permute.xlu0 %2621
  %2623 = vrot.lane.b32.xlu0 %v2588, 112
  %v2624 = vpop.permute.xlu0 %2623
  %2625 = vrot.lane.b32.xlu0 %v2589, 112
  %v2626 = vpop.permute.xlu0 %2625
  %2627 = vrot.lane.b32.xlu0 %v2590, 112
  %v2628 = vpop.permute.xlu0 %2627
  %2629 = vrot.lane.b32.xlu0 %v2591, 112
  %v2630 = vpop.permute.xlu0 %2629
  %2631 = vrot.lane.b32.xlu0 %v2592, 112
  %v2632 = vpop.permute.xlu0 %2631
  %2633 = vrot.lane.b32.xlu0 %v2593, 112
  %v2634 = vpop.permute.xlu0 %2633
  %2635 = vrot.lane.b32.xlu0 %v2594, 112
  %v2636 = vpop.permute.xlu0 %2635
  %2637 = vrot.lane.b32.xlu0 %v2595, 112
  %v2638 = vpop.permute.xlu0 %2637
  %2639 = vrot.lane.b32.xlu0 %v2596, 112
  %v2640 = vpop.permute.xlu0 %2639
  %2641 = vrot.lane.b32.xlu0 %v2597, 112
  %v2642 = vpop.permute.xlu0 %2641
  %2643 = vrot.lane.b32.xlu0 %v2598, 112
  %v2644 = vpop.permute.xlu0 %2643
  %2645 = vrot.lane.b32.xlu0 %v2599, 112
  %v2646 = vpop.permute.xlu0 %2645
  %2647 = vrot.lane.b32.xlu0 %v2600, 112
  %v2648 = vpop.permute.xlu0 %2647
  %v2649 = vsel %vm123, %v2618, %v2620
  %v2650 = vsel %vm123, %v2622, %v2624
  %v2651 = vsel %vm123, %v2626, %v2628
  %v2652 = vsel %vm123, %v2630, %v2632
  %v2653 = vsel %vm123, %v2634, %v2636
  %v2654 = vsel %vm123, %v2638, %v2640
  %v2655 = vsel %vm123, %v2642, %v2644
  %v2656 = vsel %vm123, %v2646, %v2648
  %v2665 = vadd.f32 %v2504, %v2649
  %v2666 = vadd.f32 %v2505, %v2650
  %v2667 = vadd.f32 %v2506, %v2651
  %v2668 = vadd.f32 %v2507, %v2652
  %v2669 = vadd.f32 %v2508, %v2653
  %v2670 = vadd.f32 %v2509, %v2654
  %v2671 = vadd.f32 %v2510, %v2655
  %v2672 = vadd.f32 %v2511, %v2656
  %v2673 = vld [vmem:[%s1 + $0x1a] sm:$0x1]
  %v2674 = vlaneseq
  %v2675 = vshrl.u32 %v2674, 7
  %v2676 = vsub.s32 0, %v2675
  %v2677 = vrot.slane %v2673, %v2676
  %2679 = vrot.lane.b32.xlu0 %v2677, 32
  %v2680 = vpop.permute.xlu0 %2679
  %v2682 = vmul.f32 %v2461, %v2680
  %v2683 = vmul.f32 %v2546, %v2680
  %v2684 = vmul.f32 %v2464, %v2680
  %v2685 = vmul.f32 %v2549, %v2680
  %v2686 = vmul.f32 %v2467, %v2680
  %v2687 = vmul.f32 %v2552, %v2680
  %v2688 = vmul.f32 %v2470, %v2680
  %v2689 = vmul.f32 %v2555, %v2680
  %v2690 = vmul.f32 %v2473, %v2680
  %v2691 = vmul.f32 %v2558, %v2680
  %v2692 = vmul.f32 %v2476, %v2680
  %v2693 = vmul.f32 %v2561, %v2680
  %v2694 = vmul.f32 %v2479, %v2680
  %v2695 = vmul.f32 %v2564, %v2680
  %v2696 = vmul.f32 %v2482, %v2680
  %v2697 = vmul.f32 %v2567, %v2680
  %2714 = vrot.lane.b32.xlu0 %v2682, 96
  %v2715 = vpop.permute.xlu0 %2714
  %2716 = vrot.lane.b32.xlu0 %v2683, 96
  %v2717 = vpop.permute.xlu0 %2716
  %2718 = vrot.lane.b32.xlu0 %v2684, 96
  %v2719 = vpop.permute.xlu0 %2718
  %2720 = vrot.lane.b32.xlu0 %v2685, 96
  %v2721 = vpop.permute.xlu0 %2720
  %2722 = vrot.lane.b32.xlu0 %v2686, 96
  %v2723 = vpop.permute.xlu0 %2722
  %2724 = vrot.lane.b32.xlu0 %v2687, 96
  %v2725 = vpop.permute.xlu0 %2724
  %2726 = vrot.lane.b32.xlu0 %v2688, 96
  %v2727 = vpop.permute.xlu0 %2726
  %2728 = vrot.lane.b32.xlu0 %v2689, 96
  %v2729 = vpop.permute.xlu0 %2728
  %2730 = vrot.lane.b32.xlu0 %v2690, 96
  %v2731 = vpop.permute.xlu0 %2730
  %2732 = vrot.lane.b32.xlu0 %v2691, 96
  %v2733 = vpop.permute.xlu0 %2732
  %2734 = vrot.lane.b32.xlu0 %v2692, 96
  %v2735 = vpop.permute.xlu0 %2734
  %2736 = vrot.lane.b32.xlu0 %v2693, 96
  %v2737 = vpop.permute.xlu0 %2736
  %2738 = vrot.lane.b32.xlu0 %v2694, 96
  %v2739 = vpop.permute.xlu0 %2738
  %2740 = vrot.lane.b32.xlu0 %v2695, 96
  %v2741 = vpop.permute.xlu0 %2740
  %2742 = vrot.lane.b32.xlu0 %v2696, 96
  %v2743 = vpop.permute.xlu0 %2742
  %2744 = vrot.lane.b32.xlu0 %v2697, 96
  %v2745 = vpop.permute.xlu0 %2744
  %v2746 = vsel %vm221, %v2715, %v2717
  %v2747 = vsel %vm221, %v2719, %v2721
  %v2748 = vsel %vm221, %v2723, %v2725
  %v2749 = vsel %vm221, %v2727, %v2729
  %v2750 = vsel %vm221, %v2731, %v2733
  %v2751 = vsel %vm221, %v2735, %v2737
  %v2752 = vsel %vm221, %v2739, %v2741
  %v2753 = vsel %vm221, %v2743, %v2745
  %v2762 = vadd.f32 %v2665, %v2746
  %v2763 = vadd.f32 %v2666, %v2747
  %v2764 = vadd.f32 %v2667, %v2748
  %v2765 = vadd.f32 %v2668, %v2749
  %v2766 = vadd.f32 %v2669, %v2750
  %v2767 = vadd.f32 %v2670, %v2751
  %v2768 = vadd.f32 %v2671, %v2752
  %v2769 = vadd.f32 %v2672, %v2753
  %v2770 = vpack.c.bf16 %v2763, %v2762
  %v2771 = vpack.c.bf16 %v2765, %v2764
  %v2772 = vpack.c.bf16 %v2767, %v2766
  %v2773 = vpack.c.bf16 %v2769, %v2768
  %v2774 = vld [vmem:[%s2] sm:$0xf]
  %v2775 = vld [vmem:[%s2 + $0x4] sm:$0xf]
  %v2776 = vld [vmem:[%s2 + $0x8] sm:$0xf]
  %v2777 = vld [vmem:[%s2 + $0xc] sm:$0xf]
  %v2778 = vld [vmem:[%s2 + $0x10] sm:$0xf]
  %v2779 = vld [vmem:[%s2 + $0x14] sm:$0xf]
  %v2780 = vld [vmem:[%s2 + $0x18] sm:$0xf]
  %v2781 = vld [vmem:[%s2 + $0x1c] sm:$0xf]
  %v2782 = vld [vmem:[%s2 + $0x20] sm:$0xf]
  %v2783 = vld [vmem:[%s2 + $0x24] sm:$0xf]
  %v2784 = vld [vmem:[%s2 + $0x28] sm:$0xf]
  %v2785 = vld [vmem:[%s2 + $0x2c] sm:$0xf]
  %v2786 = vld [vmem:[%s2 + $0x30] sm:$0xf]
  %v2787 = vld [vmem:[%s2 + $0x34] sm:$0xf]
  %v2788 = vld [vmem:[%s2 + $0x38] sm:$0xf]
  %v2789 = vld [vmem:[%s2 + $0x3c] sm:$0xf]
  %v2806 = vunpack.c.l.b16 %v2774
  %v2807 = vunpack.c.l.b16 %v2775
  %v2808 = vunpack.c.l.b16 %v2776
  %v2809 = vunpack.c.l.b16 %v2777
  %v2810 = vunpack.c.l.b16 %v2778
  %v2811 = vunpack.c.l.b16 %v2779
  %v2812 = vunpack.c.l.b16 %v2780
  %v2813 = vunpack.c.l.b16 %v2781
  %v2814 = vunpack.c.l.b16 %v2782
  %v2815 = vunpack.c.l.b16 %v2783
  %v2816 = vunpack.c.l.b16 %v2784
  %v2817 = vunpack.c.l.b16 %v2785
  %v2818 = vunpack.c.l.b16 %v2786
  %v2819 = vunpack.c.l.b16 %v2787
  %v2820 = vunpack.c.l.b16 %v2788
  %v2821 = vunpack.c.l.b16 %v2789
  %v2822 = vpack.c.b16 %v2807, %v2806
  %v2823 = vpack.c.b16 %v2809, %v2808
  %v2824 = vpack.c.b16 %v2811, %v2810
  %v2825 = vpack.c.b16 %v2813, %v2812
  %v2826 = vpack.c.b16 %v2815, %v2814
  %v2827 = vpack.c.b16 %v2817, %v2816
  %v2828 = vpack.c.b16 %v2819, %v2818
  %v2829 = vpack.c.b16 %v2821, %v2820
  %2838 = vmatprep.subr.bf16.mxu0 0
  %2839 = vmatpush1.bf16.msra.mxu0 %v2822
  %2840 = vmatprep.subr.bf16.mxu0 0
  %2841 = vmatpush1.bf16.msra.mxu0 %v2823
  %2842 = vmatprep.subr.bf16.mxu0 0
  %2843 = vmatpush1.bf16.msra.mxu0 %v2824
  %2844 = vmatprep.subr.bf16.mxu0 0
  %2845 = vmatpush1.bf16.msra.mxu0 %v2825
  %2846 = vmatprep.subr.bf16.mxu0 0
  %2847 = vmatpush1.bf16.msra.mxu0 %v2826
  %2848 = vmatprep.subr.bf16.mxu0 0
  %2849 = vmatpush1.bf16.msra.mxu0 %v2827
  %2850 = vmatprep.subr.bf16.mxu0 0
  %2851 = vmatpush1.bf16.msra.mxu0 %v2828
  %2852 = vmatprep.subr.bf16.mxu0 0
  %2853 = vmatpush1.bf16.msra.mxu0 %v2829
  %2854 = vmatprep.subr.bf16.mxu0 0
  %2855 = vmatpush1.bf16.msra.mxu0 0
  %2856 = vmatprep.subr.bf16.mxu0 0
  %2857 = vmatpush1.bf16.msra.mxu0 0
  %2858 = vmatprep.subr.bf16.mxu0 0
  %2859 = vmatpush1.bf16.msra.mxu0 0
  %2860 = vmatprep.subr.bf16.mxu0 0
  %2861 = vmatpush1.bf16.msra.mxu0 0
  %2862 = vmatprep.subr.bf16.mxu0 0
  %2863 = vmatpush1.bf16.msra.mxu0 0
  %2864 = vmatprep.subr.bf16.mxu0 0
  %2865 = vmatpush1.bf16.msra.mxu0 0
  %2866 = vmatprep.subr.bf16.mxu0 0
  %2867 = vmatpush1.bf16.msra.mxu0 0
  %2868 = vmatprep.subr.bf16.mxu0 0
  %2869 = vmatpush1.bf16.msra.mxu0 0
  %2870 = vmatprep.mubr.bf16.mxu0 0
  %2871 = vmatmul.mubr.bf16.gmra.mrb[0].mxu0 %v2770
  %v2872 = vpop.f32.mrb[0].mxu0
  %v2873 = vadd.f32 0.0, %v2872
  %v2874 = vpop.f32.mrb[0].mxu0
  %v2875 = vpop.f32.mrb[0].mxu0
  %v2876 = vadd.f32 0.0, %v2875
  %v2877 = vpop.f32.mrb[0].mxu0
  %2878 = vmatprep.mubr.bf16.mxu0 0
  %2879 = vmatmul.mubr.bf16.gmra.mrb[0].mxu0 %v2771
  %v2880 = vpop.f32.mrb[0].mxu0
  %v2881 = vadd.f32 0.0, %v2880
  %v2882 = vpop.f32.mrb[0].mxu0
  %v2883 = vpop.f32.mrb[0].mxu0
  %v2884 = vadd.f32 0.0, %v2883
  %v2885 = vpop.f32.mrb[0].mxu0
  %2886 = vmatprep.mubr.bf16.mxu0 0
  %2887 = vmatmul.mubr.bf16.gmra.mrb[0].mxu0 %v2772
  %v2888 = vpop.f32.mrb[0].mxu0
  %v2889 = vadd.f32 0.0, %v2888
  %v2890 = vpop.f32.mrb[0].mxu0
  %v2891 = vpop.f32.mrb[0].mxu0
  %v2892 = vadd.f32 0.0, %v2891
  %v2893 = vpop.f32.mrb[0].mxu0
  %2894 = vmatprep.mubr.bf16.mxu0 0
  %2895 = vmatmul.mubr.bf16.gmra.mrb[0].mxu0 %v2773
  %v2896 = vpop.f32.mrb[0].mxu0
  %v2897 = vadd.f32 0.0, %v2896
  %v2898 = vpop.f32.mrb[0].mxu0
  %v2899 = vpop.f32.mrb[0].mxu0
  %v2900 = vadd.f32 0.0, %v2899
  %v2901 = vpop.f32.mrb[0].mxu0
  %2902 = vdwg.mxu0
  %v2903 = vadd.f32 %v2873, %v2876
  %v2904 = vadd.f32 %v2903, %v2881
  %v2905 = vadd.f32 %v2904, %v2884
  %v2906 = vadd.f32 %v2905, %v2889
  %v2907 = vadd.f32 %v2906, %v2892
  %v2908 = vadd.f32 %v2907, %v2897
  %v2909 = vadd.f32 %v2908, %v2900
  %v2910 = vrot.slane %v2909, 4
  %v2911 = vadd.f32 %v2909, %v2910
  %v2912 = vrot.slane %v2911, 2
  %v2913 = vadd.f32 %v2911, %v2912
  %v2914 = vrot.slane %v2913, 1
  %v2915 = vadd.f32 %v2913, %v2914
  %v2916 = vmul.f32 %v2873, %v2873
  %v2917 = vmul.f32 %v2876, %v2876
  %v2918 = vmul.f32 %v2881, %v2881
  %v2919 = vmul.f32 %v2884, %v2884
  %v2920 = vmul.f32 %v2889, %v2889
  %v2921 = vmul.f32 %v2892, %v2892
  %v2922 = vmul.f32 %v2897, %v2897
  %v2923 = vmul.f32 %v2900, %v2900
  %v2924 = vadd.f32 %v2916, %v2917
  %v2925 = vadd.f32 %v2924, %v2918
  %v2926 = vadd.f32 %v2925, %v2919
  %v2927 = vadd.f32 %v2926, %v2920
  %v2928 = vadd.f32 %v2927, %v2921
  %v2929 = vadd.f32 %v2928, %v2922
  %v2930 = vadd.f32 %v2929, %v2923
  %v2931 = vrot.slane %v2930, 4
  %v2932 = vadd.f32 %v2930, %v2931
  %v2933 = vrot.slane %v2932, 2
  %v2934 = vadd.f32 %v2932, %v2933
  %v2935 = vrot.slane %v2934, 1
  %v2936 = vadd.f32 %v2934, %v2935
  %2937 = vrot.lane.b32.xlu0 %v2915, 64
  %v2938 = vpop.permute.xlu0 %2937
  %v2939 = vadd.f32 %v2915, %v2938
  %2940 = vrot.lane.b32.xlu0 %v2936, 64
  %v2941 = vpop.permute.xlu0 %2940
  %v2942 = vadd.f32 %v2936, %v2941
  %2943 = vrot.lane.b32.xlu0 %v2939, 32
  %v2944 = vpop.permute.xlu0 %2943
  %v2945 = vadd.f32 %v2939, %v2944
  %2946 = vrot.lane.b32.xlu0 %v2942, 32
  %v2947 = vpop.permute.xlu0 %2946
  %v2948 = vadd.f32 %v2942, %v2947
  %2949 = vrot.lane.b32.xlu0 %v2945, 16
  %v2950 = vpop.permute.xlu0 %2949
  %v2951 = vadd.f32 %v2945, %v2950
  %2952 = vrot.lane.b32.xlu0 %v2948, 16
  %v2953 = vpop.permute.xlu0 %2952
  %v2954 = vadd.f32 %v2948, %v2953
  %v2955 = vmul.f32 %v2951, 0.001953125
  %v2956 = vmul.f32 %v2954, 0.001953125
  %v2957 = vmul.f32 %v2955, %v2955
  %v2958 = vsub.f32 %v2956, %v2957
  %v2959 = vld [vmem:[%s3] sm:$0x1]
  %v2960 = vadd.f32 %v2958, 1e-05
  %v2961 = vrsqrt.pop %v2960
  %v2962 = vmul.f32 %v2959, %v2961
  %v2963 = vld [vmem:[%s4] sm:$0x1]
  %v2964 = vmul.f32 %v2955, %v2962
  %v2965 = vsub.f32 %v2963, %v2964
  %v2967 = vlaneseq
  %v2968 = vshrl.u32 %v2967, 7
  %v2969 = vsub.s32 0, %v2968
  %v2970 = vrot.slane %v2962, %v2969
  %v2972 = vmul.f32 %v2873, %v2970
  %v2973 = vmul.f32 %v2876, %v2970
  %v2974 = vmul.f32 %v2881, %v2970
  %v2975 = vmul.f32 %v2884, %v2970
  %v2976 = vmul.f32 %v2889, %v2970
  %v2977 = vmul.f32 %v2892, %v2970
  %v2978 = vmul.f32 %v2897, %v2970
  %v2979 = vmul.f32 %v2900, %v2970
  %v2981 = vlaneseq
  %v2982 = vshrl.u32 %v2981, 7
  %v2983 = vsub.s32 0, %v2982
  %v2984 = vrot.slane %v2965, %v2983
  %v2986 = vadd.f32 %v2972, %v2984
  %v2987 = vadd.f32 %v2973, %v2984
  %v2988 = vadd.f32 %v2974, %v2984
  %v2989 = vadd.f32 %v2975, %v2984
  %v2990 = vadd.f32 %v2976, %v2984
  %v2991 = vadd.f32 %v2977, %v2984
  %v2992 = vadd.f32 %v2978, %v2984
  %v2993 = vadd.f32 %v2979, %v2984
  %2994 = vrot.lane.b32.xlu0 %v1200, 112
  %v2995 = vpop.permute.xlu0 %2994
  %2996 = vrot.lane.b32.xlu0 %v1285, 112
  %v2997 = vpop.permute.xlu0 %2996
  %2998 = vrot.lane.b32.xlu0 %v1203, 112
  %v2999 = vpop.permute.xlu0 %2998
  %3000 = vrot.lane.b32.xlu0 %v1288, 112
  %v3001 = vpop.permute.xlu0 %3000
  %3002 = vrot.lane.b32.xlu0 %v1206, 112
  %v3003 = vpop.permute.xlu0 %3002
  %3004 = vrot.lane.b32.xlu0 %v1291, 112
  %v3005 = vpop.permute.xlu0 %3004
  %3006 = vrot.lane.b32.xlu0 %v1209, 112
  %v3007 = vpop.permute.xlu0 %3006
  %3008 = vrot.lane.b32.xlu0 %v1294, 112
  %v3009 = vpop.permute.xlu0 %3008
  %3010 = vrot.lane.b32.xlu0 %v1212, 112
  %v3011 = vpop.permute.xlu0 %3010
  %3012 = vrot.lane.b32.xlu0 %v1297, 112
  %v3013 = vpop.permute.xlu0 %3012
  %3014 = vrot.lane.b32.xlu0 %v1215, 112
  %v3015 = vpop.permute.xlu0 %3014
  %3016 = vrot.lane.b32.xlu0 %v1300, 112
  %v3017 = vpop.permute.xlu0 %3016
  %3018 = vrot.lane.b32.xlu0 %v1218, 112
  %v3019 = vpop.permute.xlu0 %3018
  %3020 = vrot.lane.b32.xlu0 %v1303, 112
  %v3021 = vpop.permute.xlu0 %3020
  %3022 = vrot.lane.b32.xlu0 %v1221, 112
  %v3023 = vpop.permute.xlu0 %3022
  %3024 = vrot.lane.b32.xlu0 %v1306, 112
  %v3025 = vpop.permute.xlu0 %3024
  %v3026 = vsel %vm123, %v2995, %v2997
  %v3027 = vsel %vm123, %v2999, %v3001
  %v3028 = vsel %vm123, %v3003, %v3005
  %v3029 = vsel %vm123, %v3007, %v3009
  %v3030 = vsel %vm123, %v3011, %v3013
  %v3031 = vsel %vm123, %v3015, %v3017
  %v3032 = vsel %vm123, %v3019, %v3021
  %v3033 = vsel %vm123, %v3023, %v3025
  %v3042 = vadd.f32 %v2986, %v3026
  %v3043 = vadd.f32 %v2987, %v3027
  %v3044 = vadd.f32 %v2988, %v3028
  %v3045 = vadd.f32 %v2989, %v3029
  %v3046 = vadd.f32 %v2990, %v3030
  %v3047 = vadd.f32 %v2991, %v3031
  %v3048 = vadd.f32 %v2992, %v3032
  %v3049 = vadd.f32 %v2993, %v3033
  %v3050 = vmax.f32 %v3042, 0.0
  %v3051 = vmax.f32 %v3043, 0.0
  %v3052 = vmax.f32 %v3044, 0.0
  %v3053 = vmax.f32 %v3045, 0.0
  %v3054 = vmax.f32 %v3046, 0.0
  %v3055 = vmax.f32 %v3047, 0.0
  %v3056 = vmax.f32 %v3048, 0.0
  %v3057 = vmax.f32 %v3049, 0.0
  %3058 = vst [vmem:[%s5] sm:$0xff] %v3050
  %3059 = vst [vmem:[%s5 + $0x8] sm:$0xff] %v3051
  %3060 = vst [vmem:[%s5 + $0x10] sm:$0xff] %v3052
  %3061 = vst [vmem:[%s5 + $0x18] sm:$0xff] %v3053
  %3062 = vst [vmem:[%s5 + $0x20] sm:$0xff] %v3054
  %3063 = vst [vmem:[%s5 + $0x28] sm:$0xff] %v3055
  %3064 = vst [vmem:[%s5 + $0x30] sm:$0xff] %v3056
  %3065 = vst [vmem:[%s5 + $0x38] sm:$0xff] %v3057
  // Predicated region
  $region22: #{separable_conv_block_3d.1} parent=0 // pred_check
    _
  $region23: #{separable_conv_block_3d.1} parent=0 // pred_check_branch
    %3067 = sbr.rel (0) target = $region25
  $region24: #{separable_conv_block_3d.1} parent=0 // pred_region
    _
  $region25: #{separable_conv_block_3d.1} parent=0 // pred_fallthru
    _
  // Predicated region
  $region26: #{separable_conv_block_3d.1} parent=0 // pred_check
    _
  $region27: #{separable_conv_block_3d.1} parent=0 // pred_check_branch
    %3069 = sbr.rel (0) target = $region29
  $region28: #{separable_conv_block_3d.1} parent=0 // pred_region
    _
  $region29: #{separable_conv_block_3d.1} parent=0 // pred_fallthru
    _

</llo_original>
